<compile_context>
chip_gen: v7x
topology: tpu7x:2x2x1
jax: 0.10.0
libtpu: 0.0.40
codegen_flags: <defaults>
</compile_context>

<pallas_src>
import functools

import jax
import jax.numpy as jnp
from jax.experimental import pallas as pl
from jax.experimental.pallas import tpu as pltpu


def _round_up(x, m):
    return (x + m - 1) // m * m


# --------------------------------------------------------------------------
# Pallas kernel: (tm, Kp) @ (Kp, Np) + bias (+ optional fused ReLU) on the MXU
# --------------------------------------------------------------------------
def _matmul_bias_kernel(x_ref, w_ref, b_ref, o_ref, *, apply_relu):
    acc = jnp.dot(x_ref[...], w_ref[...], preferred_element_type=jnp.float32)
    acc = acc + b_ref[...]                     # (tm, Np) + (1, Np) broadcast
    if apply_relu:
        acc = jnp.maximum(acc, 0.0)
    o_ref[...] = acc.astype(o_ref.dtype)


def matmul_bias_pallas(patches, wmat, bvec, *, apply_relu, out_dtype, tm=512):
    """(M, K) @ (K, N) + b with K/N zero-padded to 128-lane multiples."""
    M, K = patches.shape
    Kw, N = wmat.shape
    assert K == Kw
    Kp = _round_up(K, 128)
    Np = _round_up(N, 128)
    # Large M tiles amortize per-grid-step overhead (~0.35us); keep the tile a
    # multiple of 8 sublanes.  With M = B*Ho*Wo = 2048 this gives 4 parallel
    # steps, enough to feed both TensorCores on v7x.
    tm = min(tm, _round_up(M, 8))
    Mp = _round_up(M, tm)

    # bf16 operands (MXU-native), f32 accumulation inside the kernel.
    x_p = jnp.pad(patches.astype(jnp.bfloat16), ((0, Mp - M), (0, Kp - K)))
    w_p = jnp.pad(wmat.astype(jnp.bfloat16), ((0, Kp - K), (0, Np - N)))
    b_p = jnp.pad(bvec.astype(jnp.float32).reshape(1, N), ((0, 0), (0, Np - N)))

    out_itemsize = jnp.dtype(out_dtype).itemsize
    cost = pl.CostEstimate(
        flops=2 * Mp * Kp * Np,
        transcendentals=0,
        bytes_accessed=x_p.size * 2 + w_p.size * 2 + b_p.size * 4
        + Mp * Np * out_itemsize,
    )

    out = pl.pallas_call(
        functools.partial(_matmul_bias_kernel, apply_relu=apply_relu),
        out_shape=jax.ShapeDtypeStruct((Mp, Np), out_dtype),
        grid=(Mp // tm,),
        in_specs=[
            pl.BlockSpec((tm, Kp), lambda i: (i, 0)),
            pl.BlockSpec((Kp, Np), lambda i: (0, 0)),
            pl.BlockSpec((1, Np), lambda i: (0, 0)),
        ],
        out_specs=pl.BlockSpec((tm, Np), lambda i: (i, 0)),
        compiler_params=pltpu.CompilerParams(dimension_semantics=("parallel",)),
        cost_estimate=cost,
    )(x_p, w_p, b_p)
    return out[:M, :N]


# --------------------------------------------------------------------------
# NHWC glue: dilation/padding for the transposed conv, stride-1 im2col
# --------------------------------------------------------------------------
def _dilate_pad_nhwc(x, k, stride, padding, output_padding):
    B, H, W, C = x.shape
    if stride > 1:
        Hd, Wd = (H - 1) * stride + 1, (W - 1) * stride + 1
        xd = jnp.zeros((B, Hd, Wd, C), x.dtype).at[:, ::stride, ::stride, :].set(x)
    else:
        xd = x
    lo = k - 1 - padding
    hi = k - 1 - padding + output_padding
    assert lo >= 0, "padding > kernel_size - 1 is not supported"
    return jnp.pad(xd, ((0, 0), (lo, hi), (lo, hi), (0, 0)))


def _im2col_nhwc(xp, k):
    """Stride-1 patch extraction on a pre-padded NHWC tensor.
    Returns (B*Ho*Wo, k*k*C) with column order (kh, kw, c)."""
    B, Hp, Wp, C = xp.shape
    Ho, Wo = Hp - k + 1, Wp - k + 1
    cols = [xp[:, kh:kh + Ho, kw:kw + Wo, :] for kh in range(k) for kw in range(k)]
    patches = jnp.concatenate(cols, axis=-1)            # (B, Ho, Wo, k*k*C)
    return patches.reshape(B * Ho * Wo, k * k * C), Ho, Wo


# --------------------------------------------------------------------------
# BasicDeconvBlock: ConvTranspose2d(s, p, output_padding=1) -> ReLU -> Conv2d
# --------------------------------------------------------------------------
def init_basic_deconv_block(key, in_channel, out_channel, kernel_size):
    """Deterministic PyTorch-style uniform init."""
    k1, k2, k3, k4 = jax.random.split(key, 4)
    bound1 = 1.0 / float(out_channel * kernel_size * kernel_size) ** 0.5
    bound2 = 1.0 / float(out_channel * kernel_size * kernel_size) ** 0.5
    return {
        # ConvTranspose2d weight layout: (in_channel, out_channel, kH, kW)
        "w1": jax.random.uniform(k1, (in_channel, out_channel, kernel_size, kernel_size),
                                 jnp.float32, -bound1, bound1),
        "b1": jax.random.uniform(k2, (out_channel,), jnp.float32, -bound1, bound1),
        # Conv2d weight layout: (out_channel, out_channel, kH, kW)
        "w2": jax.random.uniform(k3, (out_channel, out_channel, kernel_size, kernel_size),
                                 jnp.float32, -bound2, bound2),
        "b2": jax.random.uniform(k4, (out_channel,), jnp.float32, -bound2, bound2),
    }


def basic_deconv_block_forward(params, x_nchw, *, stride, padding, output_padding=1):
    w1, b1, w2, b2 = params["w1"], params["b1"], params["w2"], params["b2"]
    in_c, out_c, k, _ = w1.shape
    B = x_nchw.shape[0]

    x = x_nchw.transpose(0, 2, 3, 1)                     # NCHW -> NHWC once

    # --- ConvTranspose2d (+ fused ReLU) ---
    xdp = _dilate_pad_nhwc(x, k, stride, padding, output_padding)
    p1, Ho, Wo = _im2col_nhwc(xdp, k)
    # Equivalent conv weight: W[o,c,kh,kw] = w1[c,o,k-1-kh,k-1-kw]; column order (kh,kw,c).
    w1m = jnp.flip(w1, axis=(2, 3)).transpose(2, 3, 0, 1).reshape(k * k * in_c, out_c)
    h_flat = matmul_bias_pallas(p1, w1m, b1, apply_relu=True, out_dtype=jnp.bfloat16)
    h = h_flat.reshape(B, Ho, Wo, out_c)                 # intermediate stays NHWC/bf16

    # --- Conv2d(out_c, out_c, k, stride=1, padding=1) ---
    k2 = w2.shape[2]
    hp = jnp.pad(h, ((0, 0), (1, 1), (1, 1), (0, 0)))
    p2, Ho2, Wo2 = _im2col_nhwc(hp, k2)
    w2m = w2.transpose(2, 3, 1, 0).reshape(k2 * k2 * out_c, out_c)
    y_flat = matmul_bias_pallas(p2, w2m, b2, apply_relu=False, out_dtype=jnp.float32)
    y = y_flat.reshape(B, Ho2, Wo2, out_c)
    return y.transpose(0, 3, 1, 2)                       # NHWC -> NCHW once at the end


# --------------------------------------------------------------------------
# Pure-JAX reference (same bf16 operand rounding, f32 math) for sanity check
# --------------------------------------------------------------------------
def _ref_forward(params, x, *, stride, padding, output_padding=1):
    r = lambda a: a.astype(jnp.bfloat16).astype(jnp.float32)
    w1, b1, w2, b2 = params["w1"], params["b1"], params["w2"], params["b2"]
    k = w1.shape[2]
    lo = k - 1 - padding
    hi = lo + output_padding
    w1c = jnp.flip(w1, (2, 3)).transpose(1, 0, 2, 3)     # (out, in, kh, kw)
    h = jax.lax.conv_general_dilated(
        r(x), r(w1c), window_strides=(1, 1),
        padding=((lo, hi), (lo, hi)), lhs_dilation=(stride, stride),
        dimension_numbers=("NCHW", "OIHW", "NCHW"))
    h = jnp.maximum(h + b1.reshape(1, -1, 1, 1), 0.0)
    h = r(h)                                             # kernel stores h as bf16
    y = jax.lax.conv_general_dilated(
        h, r(w2), window_strides=(1, 1), padding=((1, 1), (1, 1)),
        dimension_numbers=("NCHW", "OIHW", "NCHW"))
    return y + b2.reshape(1, -1, 1, 1)


if __name__ == "__main__":
    # Small shapes consistent with the module: batch=2, in_ch=4, out_ch=8, 16x16.
    # stride=2 transposed conv (output_padding=1): 16x16 -> 32x32.
    B, C_IN, C_OUT, HW = 2, 4, 8, 16
    KSIZE, STRIDE, PAD = 3, 2, 1

    key = jax.random.PRNGKey(0)
    pkey, xkey = jax.random.split(key)
    params = init_basic_deconv_block(pkey, C_IN, C_OUT, KSIZE)
    x = jax.random.normal(xkey, (B, C_IN, HW, HW), dtype=jnp.float32)

    fwd = jax.jit(functools.partial(basic_deconv_block_forward,
                                    stride=STRIDE, padding=PAD, output_padding=1))
    y = jax.block_until_ready(fwd(params, x))

    y_ref = _ref_forward(params, x, stride=STRIDE, padding=PAD, output_padding=1)
    assert y.shape == (B, C_OUT, 2 * HW, 2 * HW), y.shape
    assert jnp.allclose(y, y_ref, atol=1e-2, rtol=1e-2), \
        float(jnp.max(jnp.abs(y - y_ref)))

    print("KERNEL_OK")
</pallas_src>

<mosaic_0001>
module attributes {stable_mosaic.version = 11 : i64} {
  func.func @_matmul_bias_kernel(%arg0: i32, %arg1: memref<512x128xbf16, #tpu.memory_space<vmem>>, %arg2: memref<128x128xbf16, #tpu.memory_space<vmem>>, %arg3: memref<1x128xf32, #tpu.memory_space<vmem>>, %arg4: memref<512x128xbf16, #tpu.memory_space<vmem>>) attributes {dimension_semantics = [#tpu.dimension_semantics<parallel>], iteration_bounds = array<i64: 4>, scalar_prefetch = 0 : i64, scratch_operands = 0 : i64, tpu.core_type = #tpu.core_type<tc>, window_params = [{transform_indices = @transform_0, window_bounds = array<i64: 512, 128>}, {pipeline_mode = #tpu.pipeline_mode<synchronous>, transform_indices = @transform_1, window_bounds = array<i64: 128, 128>}, {pipeline_mode = #tpu.pipeline_mode<synchronous>, transform_indices = @transform_2, window_bounds = array<i64: 1, 128>}, {transform_indices = @transform_3, window_bounds = array<i64: 512, 128>}]} {
    %c0 = arith.constant 0 : index
    %c0_0 = arith.constant 0 : index
    %0 = vector.load %arg1[%c0, %c0_0] : memref<512x128xbf16, #tpu.memory_space<vmem>>, vector<512x128xbf16>
    %c0_1 = arith.constant 0 : index
    %c0_2 = arith.constant 0 : index
    %1 = vector.load %arg2[%c0_1, %c0_2] : memref<128x128xbf16, #tpu.memory_space<vmem>>, vector<128x128xbf16>
    %cst = arith.constant dense<0.000000e+00> : vector<512x128xf32>
    %2 = tpu.matmul %0, %1, %cst {dimension_numbers = #tpu.dot_dimension_numbers<[1], [0], [0], [1], [0, 0, 1, 1], [], []>} : vector<512x128xbf16>, vector<128x128xbf16>, vector<512x128xf32> -> vector<512x128xf32>
    %c0_3 = arith.constant 0 : index
    %c0_4 = arith.constant 0 : index
    %3 = vector.load %arg3[%c0_3, %c0_4] : memref<1x128xf32, #tpu.memory_space<vmem>>, vector<1x128xf32>
    %4 = vector.broadcast %3 : vector<1x128xf32> to vector<512x128xf32>
    %5 = arith.addf %2, %4 : vector<512x128xf32>
    %cst_5 = arith.constant 0.000000e+00 : f32
    %6 = vector.broadcast %cst_5 : f32 to vector<512x128xf32>
    %7 = arith.maximumf %5, %6 : vector<512x128xf32>
    %8 = arith.truncf %7 : vector<512x128xf32> to vector<512x128xbf16>
    %c0_6 = arith.constant 0 : index
    %c0_7 = arith.constant 0 : index
    %9 = vector.load %arg4[%c0_6, %c0_7] : memref<512x128xbf16, #tpu.memory_space<vmem>>, vector<512x128xbf16>
    tpu.vector_store %arg4[%c0_6, %c0_7], %8 {strides = array<i32>} : memref<512x128xbf16, #tpu.memory_space<vmem>>, vector<512x128xbf16>,
    return
  }
  func.func @transform_0(%arg0: i32) -> (i32, i32) {
    %c0_i32 = arith.constant 0 : i32
    %c0_i32_0 = arith.constant 0 : i32
    return %arg0, %c0_i32 : i32, i32
  }
  func.func @transform_1(%arg0: i32) -> (i32, i32) {
    %c0_i32 = arith.constant 0 : i32
    %c0_i32_0 = arith.constant 0 : i32
    %c0_i32_1 = arith.constant 0 : i32
    return %c0_i32, %c0_i32_0 : i32, i32
  }
  func.func @transform_2(%arg0: i32) -> (i32, i32) {
    %c0_i32 = arith.constant 0 : i32
    %c0_i32_0 = arith.constant 0 : i32
    %c0_i32_1 = arith.constant 0 : i32
    return %c0_i32, %c0_i32_0 : i32, i32
  }
  func.func @transform_3(%arg0: i32) -> (i32, i32) {
    %c0_i32 = arith.constant 0 : i32
    %c0_i32_0 = arith.constant 0 : i32
    return %arg0, %c0_i32 : i32, i32
  }
}

module attributes {stable_mosaic.version = 11 : i64} {
  func.func @_matmul_bias_kernel(%arg0: i32, %arg1: memref<512x128xbf16, #tpu.memory_space<vmem>>, %arg2: memref<128x128xbf16, #tpu.memory_space<vmem>>, %arg3: memref<1x128xf32, #tpu.memory_space<vmem>>, %arg4: memref<512x128xf32, #tpu.memory_space<vmem>>) attributes {dimension_semantics = [#tpu.dimension_semantics<parallel>], iteration_bounds = array<i64: 4>, scalar_prefetch = 0 : i64, scratch_operands = 0 : i64, tpu.core_type = #tpu.core_type<tc>, window_params = [{transform_indices = @transform_0, window_bounds = array<i64: 512, 128>}, {pipeline_mode = #tpu.pipeline_mode<synchronous>, transform_indices = @transform_1, window_bounds = array<i64: 128, 128>}, {pipeline_mode = #tpu.pipeline_mode<synchronous>, transform_indices = @transform_2, window_bounds = array<i64: 1, 128>}, {transform_indices = @transform_3, window_bounds = array<i64: 512, 128>}]} {
    %c0 = arith.constant 0 : index
    %c0_0 = arith.constant 0 : index
    %0 = vector.load %arg1[%c0, %c0_0] : memref<512x128xbf16, #tpu.memory_space<vmem>>, vector<512x128xbf16>
    %c0_1 = arith.constant 0 : index
    %c0_2 = arith.constant 0 : index
    %1 = vector.load %arg2[%c0_1, %c0_2] : memref<128x128xbf16, #tpu.memory_space<vmem>>, vector<128x128xbf16>
    %cst = arith.constant dense<0.000000e+00> : vector<512x128xf32>
    %2 = tpu.matmul %0, %1, %cst {dimension_numbers = #tpu.dot_dimension_numbers<[1], [0], [0], [1], [0, 0, 1, 1], [], []>} : vector<512x128xbf16>, vector<128x128xbf16>, vector<512x128xf32> -> vector<512x128xf32>
    %c0_3 = arith.constant 0 : index
    %c0_4 = arith.constant 0 : index
    %3 = vector.load %arg3[%c0_3, %c0_4] : memref<1x128xf32, #tpu.memory_space<vmem>>, vector<1x128xf32>
    %4 = vector.broadcast %3 : vector<1x128xf32> to vector<512x128xf32>
    %5 = arith.addf %2, %4 : vector<512x128xf32>
    %c0_5 = arith.constant 0 : index
    %c0_6 = arith.constant 0 : index
    %6 = vector.load %arg4[%c0_5, %c0_6] : memref<512x128xf32, #tpu.memory_space<vmem>>, vector<512x128xf32>
    tpu.vector_store %arg4[%c0_5, %c0_6], %5 {strides = array<i32>} : memref<512x128xf32, #tpu.memory_space<vmem>>, vector<512x128xf32>,
    return
  }
  func.func @transform_0(%arg0: i32) -> (i32, i32) {
    %c0_i32 = arith.constant 0 : i32
    %c0_i32_0 = arith.constant 0 : i32
    return %arg0, %c0_i32 : i32, i32
  }
  func.func @transform_1(%arg0: i32) -> (i32, i32) {
    %c0_i32 = arith.constant 0 : i32
    %c0_i32_0 = arith.constant 0 : i32
    %c0_i32_1 = arith.constant 0 : i32
    return %c0_i32, %c0_i32_0 : i32, i32
  }
  func.func @transform_2(%arg0: i32) -> (i32, i32) {
    %c0_i32 = arith.constant 0 : i32
    %c0_i32_0 = arith.constant 0 : i32
    %c0_i32_1 = arith.constant 0 : i32
    return %c0_i32, %c0_i32_0 : i32, i32
  }
  func.func @transform_3(%arg0: i32) -> (i32, i32) {
    %c0_i32 = arith.constant 0 : i32
    %c0_i32_0 = arith.constant 0 : i32
    return %arg0, %c0_i32 : i32, i32
  }
}

</mosaic_0001>

<llo_original>
// kernel: basic_deconv_block_forward.2
$region0: #{basic_deconv_block_forward.2}
  #allocation0 [shape = 'u32[]', space=smem, size = 0x4, offset = 0x4, fixed_abs, tag = 'smem constant byte address 0x4 - core index']
  #allocation1 [shape = 'u32[144,128]{1,0:T(1,128)}', space=vmem, size = 0x12000, scoped, tag = 'internal scratch']
  %s0 = inlined_call_operand.vmem [shape: bf16[2048,128], index: 0, kind: input, shape index: {}]
  %s1 = inlined_call_operand.vmem [shape: bf16[128,128], index: 1, kind: input, shape index: {}]
  %s2 = inlined_call_operand.vmem [shape: f32[1,128], index: 2, kind: input, shape index: {}]
  %s3 = inlined_call_operand.vmem [shape: bf16[2048,128], index: 3, kind: output, shape index: {}]
  %s4 = sld [smem:[#allocation0]]
  $region45: #{basic_deconv_block_forward.2} parent=0
    _
  %s6 = ssub.s32 1, %s4
  %s7 = scalar_select 0, %s6, %s4
  loop: start=0, step=1, limit=6
  $region2: #{basic_deconv_block_forward.2} parent=0 // loop_pre_header
    _
  $region3: #{basic_deconv_block_forward.2} parent=0 // loop_header
    %s9 = sphi 0, %s13
    %p10 = scmp.ge.s32.totalorder %s9, 6
    %s19 = sphi 0, %s21
    %s22 = sphi 0, %s19
    %s23 = sphi 0, %s22
    %s39 = sphi 0, %s23
    %s43 = sphi 0, %s43
    %s45 = sphi 0, %s43
    %s46 = sphi 0, %s45
    %s60 = sphi 0, %s46
    %s64 = sphi 0, %s64
    %s66 = sphi 0, %s64
    %s67 = sphi 0, %s66
    %s81 = sphi 0, %s67
    %s87 = sphi 0, %s89
    %s90 = sphi 0, %s87
    %s91 = sphi 0, %s90
    %s107 = sphi 0, %s91
  $region4: #{basic_deconv_block_forward.2} parent=0 // loop_header_branch
    %12 = sbr.rel (%p10) target = $region8
  $region5: #{basic_deconv_block_forward.2} parent=0 // loop_body
    %s14 = ssub.s32 %s9, 1
    %s15 = ssub.s32 %s9, 2
    %s16 = sadd.s32 %s9, 1
    %s17 = ssub.s32 %s9, %s16
    %p18 = scmp.eq.s32.totalorder %s17, 0
    %s20 = sadd.s32 %s19, 1
    %s21 = scalar_select %p18, %s19, %s20
    %p24 = pneg %p18
    %p25 = scmp.eq.s32.totalorder %s9, 3
    %p26 = por %p24, %p25
    %p27 = scmp.ne.s32.totalorder %s19, %s22
    %p28 = scmp.eq.s32.totalorder %s9, 0
    %p29 = por %p27, %p28
    %p30 = scmp.ne.s32.totalorder %s19, %s22
    %p31 = scmp.eq.s32.totalorder %s14, 3
    %p32 = por %p30, %p31
    %p33 = scmp.ne.s32.totalorder %s22, %s23
    %p34 = scmp.eq.s32.totalorder %s14, 0
    %p35 = por %p33, %p34
    %p36 = scmp.ne.s32.totalorder %s22, %s23
    %p37 = scmp.eq.s32.totalorder %s15, 3
    %p38 = por %p36, %p37
    %p40 = scmp.ne.s32.totalorder %s23, %s39
    %p41 = scmp.eq.s32.totalorder %s15, 0
    %p42 = por %p40, %p41
    %s44 = sadd.s32 %s43, 1
    %p47 = scmp.eq.s32.totalorder %s9, 3
    %p48 = scmp.ne.s32.totalorder %s43, %s45
    %p49 = scmp.eq.s32.totalorder %s9, 0
    %p50 = por %p48, %p49
    %p51 = scmp.ne.s32.totalorder %s43, %s45
    %p52 = scmp.eq.s32.totalorder %s14, 3
    %p53 = por %p51, %p52
    %p54 = scmp.ne.s32.totalorder %s45, %s46
    %p55 = scmp.eq.s32.totalorder %s14, 0
    %p56 = por %p54, %p55
    %p57 = scmp.ne.s32.totalorder %s45, %s46
    %p58 = scmp.eq.s32.totalorder %s15, 3
    %p59 = por %p57, %p58
    %p61 = scmp.ne.s32.totalorder %s46, %s60
    %p62 = scmp.eq.s32.totalorder %s15, 0
    %p63 = por %p61, %p62
    %s65 = sadd.s32 %s64, 1
    %p68 = scmp.eq.s32.totalorder %s9, 3
    %p69 = scmp.ne.s32.totalorder %s64, %s66
    %p70 = scmp.eq.s32.totalorder %s9, 0
    %p71 = por %p69, %p70
    %p72 = scmp.ne.s32.totalorder %s64, %s66
    %p73 = scmp.eq.s32.totalorder %s14, 3
    %p74 = por %p72, %p73
    %p75 = scmp.ne.s32.totalorder %s66, %s67
    %p76 = scmp.eq.s32.totalorder %s14, 0
    %p77 = por %p75, %p76
    %p78 = scmp.ne.s32.totalorder %s66, %s67
    %p79 = scmp.eq.s32.totalorder %s15, 3
    %p80 = por %p78, %p79
    %p82 = scmp.ne.s32.totalorder %s67, %s81
    %p83 = scmp.eq.s32.totalorder %s15, 0
    %p84 = por %p82, %p83
    %s85 = ssub.s32 %s9, %s16
    %p86 = scmp.eq.s32.totalorder %s85, 0
    %s88 = sadd.s32 %s87, 1
    %s89 = scalar_select %p86, %s87, %s88
    %p92 = pneg %p86
    %p93 = scmp.eq.s32.totalorder %s9, 3
    %p94 = por %p92, %p93
    %p95 = scmp.ne.s32.totalorder %s87, %s90
    %p96 = scmp.eq.s32.totalorder %s9, 0
    %p97 = por %p95, %p96
    %p98 = scmp.ne.s32.totalorder %s87, %s90
    %p99 = scmp.eq.s32.totalorder %s14, 3
    %p100 = por %p98, %p99
    %p101 = scmp.ne.s32.totalorder %s90, %s91
    %p102 = scmp.eq.s32.totalorder %s14, 0
    %p103 = por %p101, %p102
    %p104 = scmp.ne.s32.totalorder %s90, %s91
    %p105 = scmp.eq.s32.totalorder %s15, 3
    %p106 = por %p104, %p105
    %p108 = scmp.ne.s32.totalorder %s91, %s107
    %p109 = scmp.eq.s32.totalorder %s15, 0
    %p110 = por %p108, %p109
    %p111 = scmp.le.s32.totalorder 1, %s9
    %p112 = scmp.lt.s32.totalorder %s9, 5
    %p113 = pnand %p111, %p112
    %p114 = pneg %p113
    // Predicated region
    $region9: #{basic_deconv_block_forward.2} parent=5 // pred_check
      _
    $region10: #{basic_deconv_block_forward.2} parent=5 // pred_check_branch
      %116 = sbr.rel (%p113) target = $region12
    $region11: #{basic_deconv_block_forward.2} parent=5 // pred_region
      %s117 = ssub.s32 %s9, 1
      // Predicated region
      $region13: #{basic_deconv_block_forward.2} parent=11 // pred_check
        %p118 = pneg %p56
      $region14: #{basic_deconv_block_forward.2} parent=11 // pred_check_branch
        %120 = sbr.rel (%p118) target = $region16
      $region15: #{basic_deconv_block_forward.2} parent=11 // pred_region
        _
      $region16: #{basic_deconv_block_forward.2} parent=11 // pred_fallthru
        _
      // Predicated region
      $region17: #{basic_deconv_block_forward.2} parent=11 // pred_check
        %p121 = pneg %p77
      $region18: #{basic_deconv_block_forward.2} parent=11 // pred_check_branch
        %123 = sbr.rel (%p121) target = $region20
      $region19: #{basic_deconv_block_forward.2} parent=11 // pred_region
        _
      $region20: #{basic_deconv_block_forward.2} parent=11 // pred_fallthru
        _
    $region12: #{basic_deconv_block_forward.2} parent=5 // pred_fallthru
      _
    %p124 = scmp.lt.s32.totalorder %s9, 4
    // Predicated region
    $region21: #{basic_deconv_block_forward.2} parent=5 // pred_check
      %p125 = pneg %p124
    $region22: #{basic_deconv_block_forward.2} parent=5 // pred_check_branch
      %127 = sbr.rel (%p125) target = $region24
    $region23: #{basic_deconv_block_forward.2} parent=5 // pred_region
      // Predicated region
      $region25: #{basic_deconv_block_forward.2} parent=23 // pred_check
        %p128 = pneg %p29
      $region26: #{basic_deconv_block_forward.2} parent=23 // pred_check_branch
        %130 = sbr.rel (%p128) target = $region28
      $region27: #{basic_deconv_block_forward.2} parent=23 // pred_region
        %s131 = smul.u32 64, %s9
        %p132 = scmp.lt.s32.totalorder %s131, 255
        %s133 = scalar_select %p132, %s131, 255
        %s134 = smul.addr %s133, 4
        %s135 = scalar_lea.vmem %s0, %s134
        %s136 = smul.u32 64, %s9
      $region28: #{basic_deconv_block_forward.2} parent=23 // pred_fallthru
        _
    $region24: #{basic_deconv_block_forward.2} parent=5 // pred_fallthru
      _
    %p137 = scmp.le.s32.totalorder 1, %s9
    %p138 = scmp.lt.s32.totalorder %s9, 5
    %p139 = pnand %p137, %p138
    %p140 = pneg %p139
    // Predicated region
    $region29: #{basic_deconv_block_forward.2} parent=5 // pred_check
      _
    $region30: #{basic_deconv_block_forward.2} parent=5 // pred_check_branch
      %142 = sbr.rel (%p139) target = $region32
    $region31: #{basic_deconv_block_forward.2} parent=5 // pred_region
      %s143 = ssub.s32 %s9, 1
      %s144 = smul.u32 64, %s14
      %p145 = scmp.lt.s32.totalorder %s144, 255
      %s146 = scalar_select %p145, %s144, 255
      %s147 = smul.addr %s146, 4
      %s148 = scalar_lea.vmem %s0, %s147
      %p149 = pneg %p35
      %p150 = pneg %p32
      %p151 = pneg %p56
      %p152 = pneg %p53
      %p153 = pneg %p77
      %p154 = pneg %p74
      %p155 = pneg %p103
      %p156 = pneg %p100
      %s157 = smul.u32 64, %s14
      %p158 = scmp.lt.s32.totalorder %s157, 255
      %s159 = scalar_select %p158, %s157, 255
      %s160 = smul.addr %s159, 4
      %s161 = scalar_lea.vmem %s3, %s160
      %s162 = smul.u32 64, %s14
      %p163 = scmp.lt.s32.totalorder %s162, 255
      %s164 = scalar_select %p163, %s162, 255
      %s165 = smul.addr %s164, 4
      %s166 = scalar_lea.vmem %s0, %s165
      %s167 = smul.u32 64, %s14
      %s168 = smul.u32 64, %s14
      %p169 = scmp.lt.s32.totalorder %s168, 255
      %s170 = scalar_select %p169, %s168, 255
      %s171 = smul.addr %s170, 4
      %s172 = scalar_lea.vmem %s3, %s171
      %s173 = smul.u32 64, %s14
      %v175 = vld [vmem:[%s166] sm:$0xf]
      %v176 = vld [vmem:[%s166 + $0x4] sm:$0xf]
      %v177 = vld [vmem:[%s166 + $0x8] sm:$0xf]
      %v178 = vld [vmem:[%s166 + $0xc] sm:$0xf]
      %v179 = vld [vmem:[%s166 + $0x10] sm:$0xf]
      %v180 = vld [vmem:[%s166 + $0x14] sm:$0xf]
      %v181 = vld [vmem:[%s166 + $0x18] sm:$0xf]
      %v182 = vld [vmem:[%s166 + $0x1c] sm:$0xf]
      %v183 = vld [vmem:[%s166 + $0x20] sm:$0xf]
      %v184 = vld [vmem:[%s166 + $0x24] sm:$0xf]
      %v185 = vld [vmem:[%s166 + $0x28] sm:$0xf]
      %v186 = vld [vmem:[%s166 + $0x2c] sm:$0xf]
      %v187 = vld [vmem:[%s166 + $0x30] sm:$0xf]
      %v188 = vld [vmem:[%s166 + $0x34] sm:$0xf]
      %v189 = vld [vmem:[%s166 + $0x38] sm:$0xf]
      %v190 = vld [vmem:[%s166 + $0x3c] sm:$0xf]
      %v191 = vld [vmem:[%s166 + $0x40] sm:$0xf]
      %v192 = vld [vmem:[%s166 + $0x44] sm:$0xf]
      %v193 = vld [vmem:[%s166 + $0x48] sm:$0xf]
      %v194 = vld [vmem:[%s166 + $0x4c] sm:$0xf]
      %v195 = vld [vmem:[%s166 + $0x50] sm:$0xf]
      %v196 = vld [vmem:[%s166 + $0x54] sm:$0xf]
      %v197 = vld [vmem:[%s166 + $0x58] sm:$0xf]
      %v198 = vld [vmem:[%s166 + $0x5c] sm:$0xf]
      %v199 = vld [vmem:[%s166 + $0x60] sm:$0xf]
      %v200 = vld [vmem:[%s166 + $0x64] sm:$0xf]
      %v201 = vld [vmem:[%s166 + $0x68] sm:$0xf]
      %v202 = vld [vmem:[%s166 + $0x6c] sm:$0xf]
      %v203 = vld [vmem:[%s166 + $0x70] sm:$0xf]
      %v204 = vld [vmem:[%s166 + $0x74] sm:$0xf]
      %v205 = vld [vmem:[%s166 + $0x78] sm:$0xf]
      %v206 = vld [vmem:[%s166 + $0x7c] sm:$0xf]
      %v207 = vld [vmem:[%s166 + $0x80] sm:$0xf]
      %v208 = vld [vmem:[%s166 + $0x84] sm:$0xf]
      %v209 = vld [vmem:[%s166 + $0x88] sm:$0xf]
      %v210 = vld [vmem:[%s166 + $0x8c] sm:$0xf]
      %v211 = vld [vmem:[%s166 + $0x90] sm:$0xf]
      %v212 = vld [vmem:[%s166 + $0x94] sm:$0xf]
      %v213 = vld [vmem:[%s166 + $0x98] sm:$0xf]
      %v214 = vld [vmem:[%s166 + $0x9c] sm:$0xf]
      %v215 = vld [vmem:[%s166 + $0xa0] sm:$0xf]
      %v216 = vld [vmem:[%s166 + $0xa4] sm:$0xf]
      %v217 = vld [vmem:[%s166 + $0xa8] sm:$0xf]
      %v218 = vld [vmem:[%s166 + $0xac] sm:$0xf]
      %v219 = vld [vmem:[%s166 + $0xb0] sm:$0xf]
      %v220 = vld [vmem:[%s166 + $0xb4] sm:$0xf]
      %v221 = vld [vmem:[%s166 + $0xb8] sm:$0xf]
      %v222 = vld [vmem:[%s166 + $0xbc] sm:$0xf]
      %v223 = vld [vmem:[%s166 + $0xc0] sm:$0xf]
      %v224 = vld [vmem:[%s166 + $0xc4] sm:$0xf]
      %v225 = vld [vmem:[%s166 + $0xc8] sm:$0xf]
      %v226 = vld [vmem:[%s166 + $0xcc] sm:$0xf]
      %v227 = vld [vmem:[%s166 + $0xd0] sm:$0xf]
      %v228 = vld [vmem:[%s166 + $0xd4] sm:$0xf]
      %v229 = vld [vmem:[%s166 + $0xd8] sm:$0xf]
      %v230 = vld [vmem:[%s166 + $0xdc] sm:$0xf]
      %v231 = vld [vmem:[%s166 + $0xe0] sm:$0xf]
      %v232 = vld [vmem:[%s166 + $0xe4] sm:$0xf]
      %v233 = vld [vmem:[%s166 + $0xe8] sm:$0xf]
      %v234 = vld [vmem:[%s166 + $0xec] sm:$0xf]
      %v235 = vld [vmem:[%s166 + $0xf0] sm:$0xf]
      %v236 = vld [vmem:[%s166 + $0xf4] sm:$0xf]
      %v237 = vld [vmem:[%s166 + $0xf8] sm:$0xf]
      %v238 = vld [vmem:[%s166 + $0xfc] sm:$0xf]
      %v239 = vld [vmem:[%s1] sm:$0xf]
      %v240 = vld [vmem:[%s1 + $0x4] sm:$0xf]
      %v241 = vld [vmem:[%s1 + $0x8] sm:$0xf]
      %v242 = vld [vmem:[%s1 + $0xc] sm:$0xf]
      %v243 = vld [vmem:[%s1 + $0x10] sm:$0xf]
      %v244 = vld [vmem:[%s1 + $0x14] sm:$0xf]
      %v245 = vld [vmem:[%s1 + $0x18] sm:$0xf]
      %v246 = vld [vmem:[%s1 + $0x1c] sm:$0xf]
      %v247 = vld [vmem:[%s1 + $0x20] sm:$0xf]
      %v248 = vld [vmem:[%s1 + $0x24] sm:$0xf]
      %v249 = vld [vmem:[%s1 + $0x28] sm:$0xf]
      %v250 = vld [vmem:[%s1 + $0x2c] sm:$0xf]
      %v251 = vld [vmem:[%s1 + $0x30] sm:$0xf]
      %v252 = vld [vmem:[%s1 + $0x34] sm:$0xf]
      %v253 = vld [vmem:[%s1 + $0x38] sm:$0xf]
      %v254 = vld [vmem:[%s1 + $0x3c] sm:$0xf]
      %v255 = vld [vmem:[%s2] sm:$0x1]
      %v257 = vlaneseq
      %v258 = vshrl.u32 %v257, 7
      %v259 = vsub.s32 0, %v258
      %v260 = vrot.slane %v255, %v259
      %v326 = vunpack.c.l.b16 %v175
      %v327 = vunpack.c.l.b16 %v176
      %v328 = vunpack.c.l.b16 %v177
      %v329 = vunpack.c.l.b16 %v178
      %v330 = vunpack.c.l.b16 %v179
      %v331 = vunpack.c.l.b16 %v180
      %v332 = vunpack.c.l.b16 %v181
      %v333 = vunpack.c.l.b16 %v182
      %v334 = vunpack.c.l.b16 %v183
      %v335 = vunpack.c.l.b16 %v184
      %v336 = vunpack.c.l.b16 %v185
      %v337 = vunpack.c.l.b16 %v186
      %v338 = vunpack.c.l.b16 %v187
      %v339 = vunpack.c.l.b16 %v188
      %v340 = vunpack.c.l.b16 %v189
      %v341 = vunpack.c.l.b16 %v190
      %v342 = vunpack.c.l.b16 %v191
      %v343 = vunpack.c.l.b16 %v192
      %v344 = vunpack.c.l.b16 %v193
      %v345 = vunpack.c.l.b16 %v194
      %v346 = vunpack.c.l.b16 %v195
      %v347 = vunpack.c.l.b16 %v196
      %v348 = vunpack.c.l.b16 %v197
      %v349 = vunpack.c.l.b16 %v198
      %v350 = vunpack.c.l.b16 %v199
      %v351 = vunpack.c.l.b16 %v200
      %v352 = vunpack.c.l.b16 %v201
      %v353 = vunpack.c.l.b16 %v202
      %v354 = vunpack.c.l.b16 %v203
      %v355 = vunpack.c.l.b16 %v204
      %v356 = vunpack.c.l.b16 %v205
      %v357 = vunpack.c.l.b16 %v206
      %v358 = vunpack.c.l.b16 %v207
      %v359 = vunpack.c.l.b16 %v208
      %v360 = vunpack.c.l.b16 %v209
      %v361 = vunpack.c.l.b16 %v210
      %v362 = vunpack.c.l.b16 %v211
      %v363 = vunpack.c.l.b16 %v212
      %v364 = vunpack.c.l.b16 %v213
      %v365 = vunpack.c.l.b16 %v214
      %v366 = vunpack.c.l.b16 %v215
      %v367 = vunpack.c.l.b16 %v216
      %v368 = vunpack.c.l.b16 %v217
      %v369 = vunpack.c.l.b16 %v218
      %v370 = vunpack.c.l.b16 %v219
      %v371 = vunpack.c.l.b16 %v220
      %v372 = vunpack.c.l.b16 %v221
      %v373 = vunpack.c.l.b16 %v222
      %v374 = vunpack.c.l.b16 %v223
      %v375 = vunpack.c.l.b16 %v224
      %v376 = vunpack.c.l.b16 %v225
      %v377 = vunpack.c.l.b16 %v226
      %v378 = vunpack.c.l.b16 %v227
      %v379 = vunpack.c.l.b16 %v228
      %v380 = vunpack.c.l.b16 %v229
      %v381 = vunpack.c.l.b16 %v230
      %v382 = vunpack.c.l.b16 %v231
      %v383 = vunpack.c.l.b16 %v232
      %v384 = vunpack.c.l.b16 %v233
      %v385 = vunpack.c.l.b16 %v234
      %v386 = vunpack.c.l.b16 %v235
      %v387 = vunpack.c.l.b16 %v236
      %v388 = vunpack.c.l.b16 %v237
      %v389 = vunpack.c.l.b16 %v238
      %v390 = vpack.c.b16 %v327, %v326
      %v391 = vpack.c.b16 %v329, %v328
      %v392 = vpack.c.b16 %v331, %v330
      %v393 = vpack.c.b16 %v333, %v332
      %v394 = vpack.c.b16 %v335, %v334
      %v395 = vpack.c.b16 %v337, %v336
      %v396 = vpack.c.b16 %v339, %v338
      %v397 = vpack.c.b16 %v341, %v340
      %v398 = vpack.c.b16 %v343, %v342
      %v399 = vpack.c.b16 %v345, %v344
      %v400 = vpack.c.b16 %v347, %v346
      %v401 = vpack.c.b16 %v349, %v348
      %v402 = vpack.c.b16 %v351, %v350
      %v403 = vpack.c.b16 %v353, %v352
      %v404 = vpack.c.b16 %v355, %v354
      %v405 = vpack.c.b16 %v357, %v356
      %v406 = vpack.c.b16 %v359, %v358
      %v407 = vpack.c.b16 %v361, %v360
      %v408 = vpack.c.b16 %v363, %v362
      %v409 = vpack.c.b16 %v365, %v364
      %v410 = vpack.c.b16 %v367, %v366
      %v411 = vpack.c.b16 %v369, %v368
      %v412 = vpack.c.b16 %v371, %v370
      %v413 = vpack.c.b16 %v373, %v372
      %v414 = vpack.c.b16 %v375, %v374
      %v415 = vpack.c.b16 %v377, %v376
      %v416 = vpack.c.b16 %v379, %v378
      %v417 = vpack.c.b16 %v381, %v380
      %v418 = vpack.c.b16 %v383, %v382
      %v419 = vpack.c.b16 %v385, %v384
      %v420 = vpack.c.b16 %v387, %v386
      %v421 = vpack.c.b16 %v389, %v388
      %v470 = vunpack.c.l.b16 %v239
      %v471 = vunpack.c.l.b16 %v240
      %v472 = vunpack.c.l.b16 %v241
      %v473 = vunpack.c.l.b16 %v242
      %v474 = vunpack.c.l.b16 %v243
      %v475 = vunpack.c.l.b16 %v244
      %v476 = vunpack.c.l.b16 %v245
      %v477 = vunpack.c.l.b16 %v246
      %v478 = vunpack.c.l.b16 %v247
      %v479 = vunpack.c.l.b16 %v248
      %v480 = vunpack.c.l.b16 %v249
      %v481 = vunpack.c.l.b16 %v250
      %v482 = vunpack.c.l.b16 %v251
      %v483 = vunpack.c.l.b16 %v252
      %v484 = vunpack.c.l.b16 %v253
      %v485 = vunpack.c.l.b16 %v254
      %v486 = vpack.c.b16 %v471, %v470
      %v487 = vpack.c.b16 %v473, %v472
      %v488 = vpack.c.b16 %v475, %v474
      %v489 = vpack.c.b16 %v477, %v476
      %v490 = vpack.c.b16 %v479, %v478
      %v491 = vpack.c.b16 %v481, %v480
      %v492 = vpack.c.b16 %v483, %v482
      %v493 = vpack.c.b16 %v485, %v484
      %502 = vmatprep.subr.bf16.mxu0 0
      %503 = vmatpush1.bf16.msra.mxu0 %v486
      %504 = vmatprep.subr.bf16.mxu0 0
      %505 = vmatpush1.bf16.msra.mxu0 %v487
      %506 = vmatprep.subr.bf16.mxu0 0
      %507 = vmatpush1.bf16.msra.mxu0 %v488
      %508 = vmatprep.subr.bf16.mxu0 0
      %509 = vmatpush1.bf16.msra.mxu0 %v489
      %510 = vmatprep.subr.bf16.mxu0 0
      %511 = vmatpush1.bf16.msra.mxu0 %v490
      %512 = vmatprep.subr.bf16.mxu0 0
      %513 = vmatpush1.bf16.msra.mxu0 %v491
      %514 = vmatprep.subr.bf16.mxu0 0
      %515 = vmatpush1.bf16.msra.mxu0 %v492
      %516 = vmatprep.subr.bf16.mxu0 0
      %517 = vmatpush1.bf16.msra.mxu0 %v493
      %518 = vmatprep.subr.bf16.mxu0 0
      %519 = vmatpush1.bf16.msra.mxu0 0
      %520 = vmatprep.subr.bf16.mxu0 0
      %521 = vmatpush1.bf16.msra.mxu0 0
      %522 = vmatprep.subr.bf16.mxu0 0
      %523 = vmatpush1.bf16.msra.mxu0 0
      %524 = vmatprep.subr.bf16.mxu0 0
      %525 = vmatpush1.bf16.msra.mxu0 0
      %526 = vmatprep.subr.bf16.mxu0 0
      %527 = vmatpush1.bf16.msra.mxu0 0
      %528 = vmatprep.subr.bf16.mxu0 0
      %529 = vmatpush1.bf16.msra.mxu0 0
      %530 = vmatprep.subr.bf16.mxu0 0
      %531 = vmatpush1.bf16.msra.mxu0 0
      %532 = vmatprep.subr.bf16.mxu0 0
      %533 = vmatpush1.bf16.msra.mxu0 0
      %534 = vmatprep.mubr.bf16.mxu0 0
      %535 = vmatmul.mubr.bf16.gmra.mrb[0].mxu0 %v390
      %v536 = vpop.f32.mrb[0].mxu0
      %v537 = vadd.f32 %v260, %v536
      %v538 = vpop.f32.mrb[0].mxu0
      %v539 = vpop.f32.mrb[0].mxu0
      %v540 = vadd.f32 %v260, %v539
      %v541 = vpop.f32.mrb[0].mxu0
      %542 = vmatprep.mubr.bf16.mxu0 0
      %543 = vmatmul.mubr.bf16.gmra.mrb[0].mxu0 %v391
      %v544 = vpop.f32.mrb[0].mxu0
      %v545 = vadd.f32 %v260, %v544
      %v546 = vpop.f32.mrb[0].mxu0
      %v547 = vpop.f32.mrb[0].mxu0
      %v548 = vadd.f32 %v260, %v547
      %v549 = vpop.f32.mrb[0].mxu0
      %550 = vmatprep.mubr.bf16.mxu0 0
      %551 = vmatmul.mubr.bf16.gmra.mrb[0].mxu0 %v392
      %v552 = vpop.f32.mrb[0].mxu0
      %v553 = vadd.f32 %v260, %v552
      %v554 = vpop.f32.mrb[0].mxu0
      %v555 = vpop.f32.mrb[0].mxu0
      %v556 = vadd.f32 %v260, %v555
      %v557 = vpop.f32.mrb[0].mxu0
      %558 = vmatprep.mubr.bf16.mxu0 0
      %559 = vmatmul.mubr.bf16.gmra.mrb[0].mxu0 %v393
      %v560 = vpop.f32.mrb[0].mxu0
      %v561 = vadd.f32 %v260, %v560
      %v562 = vpop.f32.mrb[0].mxu0
      %v563 = vpop.f32.mrb[0].mxu0
      %v564 = vadd.f32 %v260, %v563
      %v565 = vpop.f32.mrb[0].mxu0
      %566 = vmatprep.mubr.bf16.mxu0 0
      %567 = vmatmul.mubr.bf16.gmra.mrb[0].mxu0 %v394
      %v568 = vpop.f32.mrb[0].mxu0
      %v569 = vadd.f32 %v260, %v568
      %v570 = vpop.f32.mrb[0].mxu0
      %v571 = vpop.f32.mrb[0].mxu0
      %v572 = vadd.f32 %v260, %v571
      %v573 = vpop.f32.mrb[0].mxu0
      %574 = vmatprep.mubr.bf16.mxu0 0
      %575 = vmatmul.mubr.bf16.gmra.mrb[0].mxu0 %v395
      %v576 = vpop.f32.mrb[0].mxu0
      %v577 = vadd.f32 %v260, %v576
      %v578 = vpop.f32.mrb[0].mxu0
      %v579 = vpop.f32.mrb[0].mxu0
      %v580 = vadd.f32 %v260, %v579
      %v581 = vpop.f32.mrb[0].mxu0
      %582 = vmatprep.mubr.bf16.mxu0 0
      %583 = vmatmul.mubr.bf16.gmra.mrb[0].mxu0 %v396
      %v584 = vpop.f32.mrb[0].mxu0
      %v585 = vadd.f32 %v260, %v584
      %v586 = vpop.f32.mrb[0].mxu0
      %v587 = vpop.f32.mrb[0].mxu0
      %v588 = vadd.f32 %v260, %v587
      %v589 = vpop.f32.mrb[0].mxu0
      %590 = vmatprep.mubr.bf16.mxu0 0
      %591 = vmatmul.mubr.bf16.gmra.mrb[0].mxu0 %v397
      %v592 = vpop.f32.mrb[0].mxu0
      %v593 = vadd.f32 %v260, %v592
      %v594 = vpop.f32.mrb[0].mxu0
      %v595 = vpop.f32.mrb[0].mxu0
      %v596 = vadd.f32 %v260, %v595
      %v597 = vpop.f32.mrb[0].mxu0
      %598 = vmatprep.mubr.bf16.mxu0 0
      %599 = vmatmul.mubr.bf16.gmra.mrb[0].mxu0 %v398
      %v600 = vpop.f32.mrb[0].mxu0
      %v601 = vadd.f32 %v260, %v600
      %v602 = vpop.f32.mrb[0].mxu0
      %v603 = vpop.f32.mrb[0].mxu0
      %v604 = vadd.f32 %v260, %v603
      %v605 = vpop.f32.mrb[0].mxu0
      %606 = vmatprep.mubr.bf16.mxu0 0
      %607 = vmatmul.mubr.bf16.gmra.mrb[0].mxu0 %v399
      %v608 = vpop.f32.mrb[0].mxu0
      %v609 = vadd.f32 %v260, %v608
      %v610 = vpop.f32.mrb[0].mxu0
      %v611 = vpop.f32.mrb[0].mxu0
      %v612 = vadd.f32 %v260, %v611
      %v613 = vpop.f32.mrb[0].mxu0
      %614 = vmatprep.mubr.bf16.mxu0 0
      %615 = vmatmul.mubr.bf16.gmra.mrb[0].mxu0 %v400
      %v616 = vpop.f32.mrb[0].mxu0
      %v617 = vadd.f32 %v260, %v616
      %v618 = vpop.f32.mrb[0].mxu0
      %v619 = vpop.f32.mrb[0].mxu0
      %v620 = vadd.f32 %v260, %v619
      %v621 = vpop.f32.mrb[0].mxu0
      %622 = vmatprep.mubr.bf16.mxu0 0
      %623 = vmatmul.mubr.bf16.gmra.mrb[0].mxu0 %v401
      %v624 = vpop.f32.mrb[0].mxu0
      %v625 = vadd.f32 %v260, %v624
      %v626 = vpop.f32.mrb[0].mxu0
      %v627 = vpop.f32.mrb[0].mxu0
      %v628 = vadd.f32 %v260, %v627
      %v629 = vpop.f32.mrb[0].mxu0
      %630 = vmatprep.mubr.bf16.mxu0 0
      %631 = vmatmul.mubr.bf16.gmra.mrb[0].mxu0 %v402
      %v632 = vpop.f32.mrb[0].mxu0
      %v633 = vadd.f32 %v260, %v632
      %v634 = vpop.f32.mrb[0].mxu0
      %v635 = vpop.f32.mrb[0].mxu0
      %v636 = vadd.f32 %v260, %v635
      %v637 = vpop.f32.mrb[0].mxu0
      %638 = vmatprep.mubr.bf16.mxu0 0
      %639 = vmatmul.mubr.bf16.gmra.mrb[0].mxu0 %v403
      %v640 = vpop.f32.mrb[0].mxu0
      %v641 = vadd.f32 %v260, %v640
      %v642 = vpop.f32.mrb[0].mxu0
      %v643 = vpop.f32.mrb[0].mxu0
      %v644 = vadd.f32 %v260, %v643
      %v645 = vpop.f32.mrb[0].mxu0
      %646 = vmatprep.mubr.bf16.mxu0 0
      %647 = vmatmul.mubr.bf16.gmra.mrb[0].mxu0 %v404
      %v648 = vpop.f32.mrb[0].mxu0
      %v649 = vadd.f32 %v260, %v648
      %v650 = vpop.f32.mrb[0].mxu0
      %v651 = vpop.f32.mrb[0].mxu0
      %v652 = vadd.f32 %v260, %v651
      %v653 = vpop.f32.mrb[0].mxu0
      %654 = vmatprep.mubr.bf16.mxu0 0
      %655 = vmatmul.mubr.bf16.gmra.mrb[0].mxu0 %v405
      %v656 = vpop.f32.mrb[0].mxu0
      %v657 = vadd.f32 %v260, %v656
      %v658 = vpop.f32.mrb[0].mxu0
      %v659 = vpop.f32.mrb[0].mxu0
      %v660 = vadd.f32 %v260, %v659
      %v661 = vpop.f32.mrb[0].mxu0
      %662 = vmatprep.mubr.bf16.mxu0 0
      %663 = vmatmul.mubr.bf16.gmra.mrb[0].mxu0 %v406
      %v664 = vpop.f32.mrb[0].mxu0
      %v665 = vadd.f32 %v260, %v664
      %v666 = vpop.f32.mrb[0].mxu0
      %v667 = vpop.f32.mrb[0].mxu0
      %v668 = vadd.f32 %v260, %v667
      %v669 = vpop.f32.mrb[0].mxu0
      %670 = vmatprep.mubr.bf16.mxu0 0
      %671 = vmatmul.mubr.bf16.gmra.mrb[0].mxu0 %v407
      %v672 = vpop.f32.mrb[0].mxu0
      %v673 = vadd.f32 %v260, %v672
      %v674 = vpop.f32.mrb[0].mxu0
      %v675 = vpop.f32.mrb[0].mxu0
      %v676 = vadd.f32 %v260, %v675
      %v677 = vpop.f32.mrb[0].mxu0
      %678 = vmatprep.mubr.bf16.mxu0 0
      %679 = vmatmul.mubr.bf16.gmra.mrb[0].mxu0 %v408
      %v680 = vpop.f32.mrb[0].mxu0
      %v681 = vadd.f32 %v260, %v680
      %v682 = vpop.f32.mrb[0].mxu0
      %v683 = vpop.f32.mrb[0].mxu0
      %v684 = vadd.f32 %v260, %v683
      %v685 = vpop.f32.mrb[0].mxu0
      %686 = vmatprep.mubr.bf16.mxu0 0
      %687 = vmatmul.mubr.bf16.gmra.mrb[0].mxu0 %v409
      %v688 = vpop.f32.mrb[0].mxu0
      %v689 = vadd.f32 %v260, %v688
      %v690 = vpop.f32.mrb[0].mxu0
      %v691 = vpop.f32.mrb[0].mxu0
      %v692 = vadd.f32 %v260, %v691
      %v693 = vpop.f32.mrb[0].mxu0
      %694 = vmatprep.mubr.bf16.mxu0 0
      %695 = vmatmul.mubr.bf16.gmra.mrb[0].mxu0 %v410
      %v696 = vpop.f32.mrb[0].mxu0
      %v697 = vadd.f32 %v260, %v696
      %v698 = vpop.f32.mrb[0].mxu0
      %v699 = vpop.f32.mrb[0].mxu0
      %v700 = vadd.f32 %v260, %v699
      %v701 = vpop.f32.mrb[0].mxu0
      %702 = vmatprep.mubr.bf16.mxu0 0
      %703 = vmatmul.mubr.bf16.gmra.mrb[0].mxu0 %v411
      %v704 = vpop.f32.mrb[0].mxu0
      %v705 = vadd.f32 %v260, %v704
      %v706 = vpop.f32.mrb[0].mxu0
      %v707 = vpop.f32.mrb[0].mxu0
      %v708 = vadd.f32 %v260, %v707
      %v709 = vpop.f32.mrb[0].mxu0
      %710 = vmatprep.mubr.bf16.mxu0 0
      %711 = vmatmul.mubr.bf16.gmra.mrb[0].mxu0 %v412
      %v712 = vpop.f32.mrb[0].mxu0
      %v713 = vadd.f32 %v260, %v712
      %v714 = vpop.f32.mrb[0].mxu0
      %v715 = vpop.f32.mrb[0].mxu0
      %v716 = vadd.f32 %v260, %v715
      %v717 = vpop.f32.mrb[0].mxu0
      %718 = vmatprep.mubr.bf16.mxu0 0
      %719 = vmatmul.mubr.bf16.gmra.mrb[0].mxu0 %v413
      %v720 = vpop.f32.mrb[0].mxu0
      %v721 = vadd.f32 %v260, %v720
      %v722 = vpop.f32.mrb[0].mxu0
      %v723 = vpop.f32.mrb[0].mxu0
      %v724 = vadd.f32 %v260, %v723
      %v725 = vpop.f32.mrb[0].mxu0
      %726 = vmatprep.mubr.bf16.mxu0 0
      %727 = vmatmul.mubr.bf16.gmra.mrb[0].mxu0 %v414
      %v728 = vpop.f32.mrb[0].mxu0
      %v729 = vadd.f32 %v260, %v728
      %v730 = vpop.f32.mrb[0].mxu0
      %v731 = vpop.f32.mrb[0].mxu0
      %v732 = vadd.f32 %v260, %v731
      %v733 = vpop.f32.mrb[0].mxu0
      %734 = vmatprep.mubr.bf16.mxu0 0
      %735 = vmatmul.mubr.bf16.gmra.mrb[0].mxu0 %v415
      %v736 = vpop.f32.mrb[0].mxu0
      %v737 = vadd.f32 %v260, %v736
      %v738 = vpop.f32.mrb[0].mxu0
      %v739 = vpop.f32.mrb[0].mxu0
      %v740 = vadd.f32 %v260, %v739
      %v741 = vpop.f32.mrb[0].mxu0
      %742 = vmatprep.mubr.bf16.mxu0 0
      %743 = vmatmul.mubr.bf16.gmra.mrb[0].mxu0 %v416
      %v744 = vpop.f32.mrb[0].mxu0
      %v745 = vadd.f32 %v260, %v744
      %v746 = vpop.f32.mrb[0].mxu0
      %v747 = vpop.f32.mrb[0].mxu0
      %v748 = vadd.f32 %v260, %v747
      %v749 = vpop.f32.mrb[0].mxu0
      %750 = vmatprep.mubr.bf16.mxu0 0
      %751 = vmatmul.mubr.bf16.gmra.mrb[0].mxu0 %v417
      %v752 = vpop.f32.mrb[0].mxu0
      %v753 = vadd.f32 %v260, %v752
      %v754 = vpop.f32.mrb[0].mxu0
      %v755 = vpop.f32.mrb[0].mxu0
      %v756 = vadd.f32 %v260, %v755
      %v757 = vpop.f32.mrb[0].mxu0
      %758 = vmatprep.mubr.bf16.mxu0 0
      %759 = vmatmul.mubr.bf16.gmra.mrb[0].mxu0 %v418
      %v760 = vpop.f32.mrb[0].mxu0
      %v761 = vadd.f32 %v260, %v760
      %v762 = vpop.f32.mrb[0].mxu0
      %v763 = vpop.f32.mrb[0].mxu0
      %v764 = vadd.f32 %v260, %v763
      %v765 = vpop.f32.mrb[0].mxu0
      %766 = vmatprep.mubr.bf16.mxu0 0
      %767 = vmatmul.mubr.bf16.gmra.mrb[0].mxu0 %v419
      %v768 = vpop.f32.mrb[0].mxu0
      %v769 = vadd.f32 %v260, %v768
      %v770 = vpop.f32.mrb[0].mxu0
      %v771 = vpop.f32.mrb[0].mxu0
      %v772 = vadd.f32 %v260, %v771
      %v773 = vpop.f32.mrb[0].mxu0
      %774 = vmatprep.mubr.bf16.mxu0 0
      %775 = vmatmul.mubr.bf16.gmra.mrb[0].mxu0 %v420
      %v776 = vpop.f32.mrb[0].mxu0
      %v777 = vadd.f32 %v260, %v776
      %v778 = vpop.f32.mrb[0].mxu0
      %v779 = vpop.f32.mrb[0].mxu0
      %v780 = vadd.f32 %v260, %v779
      %v781 = vpop.f32.mrb[0].mxu0
      %782 = vmatprep.mubr.bf16.mxu0 0
      %783 = vmatmul.mubr.bf16.gmra.mrb[0].mxu0 %v421
      %v784 = vpop.f32.mrb[0].mxu0
      %v785 = vadd.f32 %v260, %v784
      %v786 = vpop.f32.mrb[0].mxu0
      %v787 = vpop.f32.mrb[0].mxu0
      %v788 = vadd.f32 %v260, %v787
      %v789 = vpop.f32.mrb[0].mxu0
      %790 = vdwg.mxu0
      %v791 = vmax.f32 %v537, 0.0
      %v792 = vmax.f32 %v540, 0.0
      %v793 = vmax.f32 %v545, 0.0
      %v794 = vmax.f32 %v548, 0.0
      %v795 = vmax.f32 %v553, 0.0
      %v796 = vmax.f32 %v556, 0.0
      %v797 = vmax.f32 %v561, 0.0
      %v798 = vmax.f32 %v564, 0.0
      %v799 = vmax.f32 %v569, 0.0
      %v800 = vmax.f32 %v572, 0.0
      %v801 = vmax.f32 %v577, 0.0
      %v802 = vmax.f32 %v580, 0.0
      %v803 = vmax.f32 %v585, 0.0
      %v804 = vmax.f32 %v588, 0.0
      %v805 = vmax.f32 %v593, 0.0
      %v806 = vmax.f32 %v596, 0.0
      %v807 = vmax.f32 %v601, 0.0
      %v808 = vmax.f32 %v604, 0.0
      %v809 = vmax.f32 %v609, 0.0
      %v810 = vmax.f32 %v612, 0.0
      %v811 = vmax.f32 %v617, 0.0
      %v812 = vmax.f32 %v620, 0.0
      %v813 = vmax.f32 %v625, 0.0
      %v814 = vmax.f32 %v628, 0.0
      %v815 = vmax.f32 %v633, 0.0
      %v816 = vmax.f32 %v636, 0.0
      %v817 = vmax.f32 %v641, 0.0
      %v818 = vmax.f32 %v644, 0.0
      %v819 = vmax.f32 %v649, 0.0
      %v820 = vmax.f32 %v652, 0.0
      %v821 = vmax.f32 %v657, 0.0
      %v822 = vmax.f32 %v660, 0.0
      %v823 = vmax.f32 %v665, 0.0
      %v824 = vmax.f32 %v668, 0.0
      %v825 = vmax.f32 %v673, 0.0
      %v826 = vmax.f32 %v676, 0.0
      %v827 = vmax.f32 %v681, 0.0
      %v828 = vmax.f32 %v684, 0.0
      %v829 = vmax.f32 %v689, 0.0
      %v830 = vmax.f32 %v692, 0.0
      %v831 = vmax.f32 %v697, 0.0
      %v832 = vmax.f32 %v700, 0.0
      %v833 = vmax.f32 %v705, 0.0
      %v834 = vmax.f32 %v708, 0.0
      %v835 = vmax.f32 %v713, 0.0
      %v836 = vmax.f32 %v716, 0.0
      %v837 = vmax.f32 %v721, 0.0
      %v838 = vmax.f32 %v724, 0.0
      %v839 = vmax.f32 %v729, 0.0
      %v840 = vmax.f32 %v732, 0.0
      %v841 = vmax.f32 %v737, 0.0
      %v842 = vmax.f32 %v740, 0.0
      %v843 = vmax.f32 %v745, 0.0
      %v844 = vmax.f32 %v748, 0.0
      %v845 = vmax.f32 %v753, 0.0
      %v846 = vmax.f32 %v756, 0.0
      %v847 = vmax.f32 %v761, 0.0
      %v848 = vmax.f32 %v764, 0.0
      %v849 = vmax.f32 %v769, 0.0
      %v850 = vmax.f32 %v772, 0.0
      %v851 = vmax.f32 %v777, 0.0
      %v852 = vmax.f32 %v780, 0.0
      %v853 = vmax.f32 %v785, 0.0
      %v854 = vmax.f32 %v788, 0.0
      %v855 = vpack.c.bf16 %v792, %v791
      %v856 = vpack.c.bf16 %v794, %v793
      %v857 = vpack.c.bf16 %v796, %v795
      %v858 = vpack.c.bf16 %v798, %v797
      %v859 = vpack.c.bf16 %v800, %v799
      %v860 = vpack.c.bf16 %v802, %v801
      %v861 = vpack.c.bf16 %v804, %v803
      %v862 = vpack.c.bf16 %v806, %v805
      %v863 = vpack.c.bf16 %v808, %v807
      %v864 = vpack.c.bf16 %v810, %v809
      %v865 = vpack.c.bf16 %v812, %v811
      %v866 = vpack.c.bf16 %v814, %v813
      %v867 = vpack.c.bf16 %v816, %v815
      %v868 = vpack.c.bf16 %v818, %v817
      %v869 = vpack.c.bf16 %v820, %v819
      %v870 = vpack.c.bf16 %v822, %v821
      %v871 = vpack.c.bf16 %v824, %v823
      %v872 = vpack.c.bf16 %v826, %v825
      %v873 = vpack.c.bf16 %v828, %v827
      %v874 = vpack.c.bf16 %v830, %v829
      %v875 = vpack.c.bf16 %v832, %v831
      %v876 = vpack.c.bf16 %v834, %v833
      %v877 = vpack.c.bf16 %v836, %v835
      %v878 = vpack.c.bf16 %v838, %v837
      %v879 = vpack.c.bf16 %v840, %v839
      %v880 = vpack.c.bf16 %v842, %v841
      %v881 = vpack.c.bf16 %v844, %v843
      %v882 = vpack.c.bf16 %v846, %v845
      %v883 = vpack.c.bf16 %v848, %v847
      %v884 = vpack.c.bf16 %v850, %v849
      %v885 = vpack.c.bf16 %v852, %v851
      %v886 = vpack.c.bf16 %v854, %v853
      %v919 = vunpack.c.l.b16 %v855
      %v920 = vunpack.c.h.b16 %v855
      %v921 = vunpack.c.l.b16 %v856
      %v922 = vunpack.c.h.b16 %v856
      %v923 = vunpack.c.l.b16 %v857
      %v924 = vunpack.c.h.b16 %v857
      %v925 = vunpack.c.l.b16 %v858
      %v926 = vunpack.c.h.b16 %v858
      %v927 = vunpack.c.l.b16 %v859
      %v928 = vunpack.c.h.b16 %v859
      %v929 = vunpack.c.l.b16 %v860
      %v930 = vunpack.c.h.b16 %v860
      %v931 = vunpack.c.l.b16 %v861
      %v932 = vunpack.c.h.b16 %v861
      %v933 = vunpack.c.l.b16 %v862
      %v934 = vunpack.c.h.b16 %v862
      %v935 = vunpack.c.l.b16 %v863
      %v936 = vunpack.c.h.b16 %v863
      %v937 = vunpack.c.l.b16 %v864
      %v938 = vunpack.c.h.b16 %v864
      %v939 = vunpack.c.l.b16 %v865
      %v940 = vunpack.c.h.b16 %v865
      %v941 = vunpack.c.l.b16 %v866
      %v942 = vunpack.c.h.b16 %v866
      %v943 = vunpack.c.l.b16 %v867
      %v944 = vunpack.c.h.b16 %v867
      %v945 = vunpack.c.l.b16 %v868
      %v946 = vunpack.c.h.b16 %v868
      %v947 = vunpack.c.l.b16 %v869
      %v948 = vunpack.c.h.b16 %v869
      %v949 = vunpack.c.l.b16 %v870
      %v950 = vunpack.c.h.b16 %v870
      %v951 = vunpack.c.l.b16 %v871
      %v952 = vunpack.c.h.b16 %v871
      %v953 = vunpack.c.l.b16 %v872
      %v954 = vunpack.c.h.b16 %v872
      %v955 = vunpack.c.l.b16 %v873
      %v956 = vunpack.c.h.b16 %v873
      %v957 = vunpack.c.l.b16 %v874
      %v958 = vunpack.c.h.b16 %v874
      %v959 = vunpack.c.l.b16 %v875
      %v960 = vunpack.c.h.b16 %v875
      %v961 = vunpack.c.l.b16 %v876
      %v962 = vunpack.c.h.b16 %v876
      %v963 = vunpack.c.l.b16 %v877
      %v964 = vunpack.c.h.b16 %v877
      %v965 = vunpack.c.l.b16 %v878
      %v966 = vunpack.c.h.b16 %v878
      %v967 = vunpack.c.l.b16 %v879
      %v968 = vunpack.c.h.b16 %v879
      %v969 = vunpack.c.l.b16 %v880
      %v970 = vunpack.c.h.b16 %v880
      %v971 = vunpack.c.l.b16 %v881
      %v972 = vunpack.c.h.b16 %v881
      %v973 = vunpack.c.l.b16 %v882
      %v974 = vunpack.c.h.b16 %v882
      %v975 = vunpack.c.l.b16 %v883
      %v976 = vunpack.c.h.b16 %v883
      %v977 = vunpack.c.l.b16 %v884
      %v978 = vunpack.c.h.b16 %v884
      %v979 = vunpack.c.l.b16 %v885
      %v980 = vunpack.c.h.b16 %v885
      %v981 = vunpack.c.l.b16 %v886
      %v982 = vunpack.c.h.b16 %v886
      %v983 = vpack.c.b16 %v919, %v919
      %v984 = vpack.c.b16 %v920, %v920
      %v985 = vpack.c.b16 %v921, %v921
      %v986 = vpack.c.b16 %v922, %v922
      %v987 = vpack.c.b16 %v923, %v923
      %v988 = vpack.c.b16 %v924, %v924
      %v989 = vpack.c.b16 %v925, %v925
      %v990 = vpack.c.b16 %v926, %v926
      %v991 = vpack.c.b16 %v927, %v927
      %v992 = vpack.c.b16 %v928, %v928
      %v993 = vpack.c.b16 %v929, %v929
      %v994 = vpack.c.b16 %v930, %v930
      %v995 = vpack.c.b16 %v931, %v931
      %v996 = vpack.c.b16 %v932, %v932
      %v997 = vpack.c.b16 %v933, %v933
      %v998 = vpack.c.b16 %v934, %v934
      %v999 = vpack.c.b16 %v935, %v935
      %v1000 = vpack.c.b16 %v936, %v936
      %v1001 = vpack.c.b16 %v937, %v937
      %v1002 = vpack.c.b16 %v938, %v938
      %v1003 = vpack.c.b16 %v939, %v939
      %v1004 = vpack.c.b16 %v940, %v940
      %v1005 = vpack.c.b16 %v941, %v941
      %v1006 = vpack.c.b16 %v942, %v942
      %v1007 = vpack.c.b16 %v943, %v943
      %v1008 = vpack.c.b16 %v944, %v944
      %v1009 = vpack.c.b16 %v945, %v945
      %v1010 = vpack.c.b16 %v946, %v946
      %v1011 = vpack.c.b16 %v947, %v947
      %v1012 = vpack.c.b16 %v948, %v948
      %v1013 = vpack.c.b16 %v949, %v949
      %v1014 = vpack.c.b16 %v950, %v950
      %v1015 = vpack.c.b16 %v951, %v951
      %v1016 = vpack.c.b16 %v952, %v952
      %v1017 = vpack.c.b16 %v953, %v953
      %v1018 = vpack.c.b16 %v954, %v954
      %v1019 = vpack.c.b16 %v955, %v955
      %v1020 = vpack.c.b16 %v956, %v956
      %v1021 = vpack.c.b16 %v957, %v957
      %v1022 = vpack.c.b16 %v958, %v958
      %v1023 = vpack.c.b16 %v959, %v959
      %v1024 = vpack.c.b16 %v960, %v960
      %v1025 = vpack.c.b16 %v961, %v961
      %v1026 = vpack.c.b16 %v962, %v962
      %v1027 = vpack.c.b16 %v963, %v963
      %v1028 = vpack.c.b16 %v964, %v964
      %v1029 = vpack.c.b16 %v965, %v965
      %v1030 = vpack.c.b16 %v966, %v966
      %v1031 = vpack.c.b16 %v967, %v967
      %v1032 = vpack.c.b16 %v968, %v968
      %v1033 = vpack.c.b16 %v969, %v969
      %v1034 = vpack.c.b16 %v970, %v970
      %v1035 = vpack.c.b16 %v971, %v971
      %v1036 = vpack.c.b16 %v972, %v972
      %v1037 = vpack.c.b16 %v973, %v973
      %v1038 = vpack.c.b16 %v974, %v974
      %v1039 = vpack.c.b16 %v975, %v975
      %v1040 = vpack.c.b16 %v976, %v976
      %v1041 = vpack.c.b16 %v977, %v977
      %v1042 = vpack.c.b16 %v978, %v978
      %v1043 = vpack.c.b16 %v979, %v979
      %v1044 = vpack.c.b16 %v980, %v980
      %v1045 = vpack.c.b16 %v981, %v981
      %v1046 = vpack.c.b16 %v982, %v982
      %1111 = vst [vmem:[%s172] sm:$0xf] %v983
      %1112 = vst [vmem:[%s172 + $0x4] sm:$0xf] %v984
      %1113 = vst [vmem:[%s172 + $0x8] sm:$0xf] %v985
      %1114 = vst [vmem:[%s172 + $0xc] sm:$0xf] %v986
      %1115 = vst [vmem:[%s172 + $0x10] sm:$0xf] %v987
      %1116 = vst [vmem:[%s172 + $0x14] sm:$0xf] %v988
      %1117 = vst [vmem:[%s172 + $0x18] sm:$0xf] %v989
      %1118 = vst [vmem:[%s172 + $0x1c] sm:$0xf] %v990
      %1119 = vst [vmem:[%s172 + $0x20] sm:$0xf] %v991
      %1120 = vst [vmem:[%s172 + $0x24] sm:$0xf] %v992
      %1121 = vst [vmem:[%s172 + $0x28] sm:$0xf] %v993
      %1122 = vst [vmem:[%s172 + $0x2c] sm:$0xf] %v994
      %1123 = vst [vmem:[%s172 + $0x30] sm:$0xf] %v995
      %1124 = vst [vmem:[%s172 + $0x34] sm:$0xf] %v996
      %1125 = vst [vmem:[%s172 + $0x38] sm:$0xf] %v997
      %1126 = vst [vmem:[%s172 + $0x3c] sm:$0xf] %v998
      %1127 = vst [vmem:[%s172 + $0x40] sm:$0xf] %v999
      %1128 = vst [vmem:[%s172 + $0x44] sm:$0xf] %v1000
      %1129 = vst [vmem:[%s172 + $0x48] sm:$0xf] %v1001
      %1130 = vst [vmem:[%s172 + $0x4c] sm:$0xf] %v1002
      %1131 = vst [vmem:[%s172 + $0x50] sm:$0xf] %v1003
      %1132 = vst [vmem:[%s172 + $0x54] sm:$0xf] %v1004
      %1133 = vst [vmem:[%s172 + $0x58] sm:$0xf] %v1005
      %1134 = vst [vmem:[%s172 + $0x5c] sm:$0xf] %v1006
      %1135 = vst [vmem:[%s172 + $0x60] sm:$0xf] %v1007
      %1136 = vst [vmem:[%s172 + $0x64] sm:$0xf] %v1008
      %1137 = vst [vmem:[%s172 + $0x68] sm:$0xf] %v1009
      %1138 = vst [vmem:[%s172 + $0x6c] sm:$0xf] %v1010
      %1139 = vst [vmem:[%s172 + $0x70] sm:$0xf] %v1011
      %1140 = vst [vmem:[%s172 + $0x74] sm:$0xf] %v1012
      %1141 = vst [vmem:[%s172 + $0x78] sm:$0xf] %v1013
      %1142 = vst [vmem:[%s172 + $0x7c] sm:$0xf] %v1014
      %1143 = vst [vmem:[%s172 + $0x80] sm:$0xf] %v1015
      %1144 = vst [vmem:[%s172 + $0x84] sm:$0xf] %v1016
      %1145 = vst [vmem:[%s172 + $0x88] sm:$0xf] %v1017
      %1146 = vst [vmem:[%s172 + $0x8c] sm:$0xf] %v1018
      %1147 = vst [vmem:[%s172 + $0x90] sm:$0xf] %v1019
      %1148 = vst [vmem:[%s172 + $0x94] sm:$0xf] %v1020
      %1149 = vst [vmem:[%s172 + $0x98] sm:$0xf] %v1021
      %1150 = vst [vmem:[%s172 + $0x9c] sm:$0xf] %v1022
      %1151 = vst [vmem:[%s172 + $0xa0] sm:$0xf] %v1023
      %1152 = vst [vmem:[%s172 + $0xa4] sm:$0xf] %v1024
      %1153 = vst [vmem:[%s172 + $0xa8] sm:$0xf] %v1025
      %1154 = vst [vmem:[%s172 + $0xac] sm:$0xf] %v1026
      %1155 = vst [vmem:[%s172 + $0xb0] sm:$0xf] %v1027
      %1156 = vst [vmem:[%s172 + $0xb4] sm:$0xf] %v1028
      %1157 = vst [vmem:[%s172 + $0xb8] sm:$0xf] %v1029
      %1158 = vst [vmem:[%s172 + $0xbc] sm:$0xf] %v1030
      %1159 = vst [vmem:[%s172 + $0xc0] sm:$0xf] %v1031
      %1160 = vst [vmem:[%s172 + $0xc4] sm:$0xf] %v1032
      %1161 = vst [vmem:[%s172 + $0xc8] sm:$0xf] %v1033
      %1162 = vst [vmem:[%s172 + $0xcc] sm:$0xf] %v1034
      %1163 = vst [vmem:[%s172 + $0xd0] sm:$0xf] %v1035
      %1164 = vst [vmem:[%s172 + $0xd4] sm:$0xf] %v1036
      %1165 = vst [vmem:[%s172 + $0xd8] sm:$0xf] %v1037
      %1166 = vst [vmem:[%s172 + $0xdc] sm:$0xf] %v1038
      %1167 = vst [vmem:[%s172 + $0xe0] sm:$0xf] %v1039
      %1168 = vst [vmem:[%s172 + $0xe4] sm:$0xf] %v1040
      %1169 = vst [vmem:[%s172 + $0xe8] sm:$0xf] %v1041
      %1170 = vst [vmem:[%s172 + $0xec] sm:$0xf] %v1042
      %1171 = vst [vmem:[%s172 + $0xf0] sm:$0xf] %v1043
      %1172 = vst [vmem:[%s172 + $0xf4] sm:$0xf] %v1044
      %1173 = vst [vmem:[%s172 + $0xf8] sm:$0xf] %v1045
      %1174 = vst [vmem:[%s172 + $0xfc] sm:$0xf] %v1046
      %s1175 = smul.u32 64, %s14
      %p1176 = scmp.lt.s32.totalorder %s1175, 255
      %s1177 = scalar_select %p1176, %s1175, 255
      %s1178 = smul.addr %s1177, 4
      %s1179 = scalar_lea.vmem %s3, %s1178
      // Predicated region
      $region33: #{basic_deconv_block_forward.2} parent=31 // pred_check
        %p1180 = pneg %p100
      $region34: #{basic_deconv_block_forward.2} parent=31 // pred_check_branch
        %1182 = sbr.rel (%p1180) target = $region36
      $region35: #{basic_deconv_block_forward.2} parent=31 // pred_region
        %s1183 = smul.u32 64, %s14
      $region36: #{basic_deconv_block_forward.2} parent=31 // pred_fallthru
        _
    $region32: #{basic_deconv_block_forward.2} parent=5 // pred_fallthru
      _
    %p1184 = scmp.le.s32.totalorder 2, %s9
    // Predicated region
    $region37: #{basic_deconv_block_forward.2} parent=5 // pred_check
      %p1185 = pneg %p1184
    $region38: #{basic_deconv_block_forward.2} parent=5 // pred_check_branch
      %1187 = sbr.rel (%p1185) target = $region40
    $region39: #{basic_deconv_block_forward.2} parent=5 // pred_region
      %s1188 = ssub.s32 %s9, 2
      // Predicated region
      $region41: #{basic_deconv_block_forward.2} parent=39 // pred_check
        %p1189 = pneg %p106
      $region42: #{basic_deconv_block_forward.2} parent=39 // pred_check_branch
        %1191 = sbr.rel (%p1189) target = $region44
      $region43: #{basic_deconv_block_forward.2} parent=39 // pred_region
        %s1192 = smul.u32 64, %s15
        %p1193 = scmp.lt.s32.totalorder %s1192, 255
        %s1194 = scalar_select %p1193, %s1192, 255
        %s1195 = smul.addr %s1194, 4
        %s1196 = scalar_lea.vmem %s3, %s1195
      $region44: #{basic_deconv_block_forward.2} parent=39 // pred_fallthru
        _
    $region40: #{basic_deconv_block_forward.2} parent=5 // pred_fallthru
      _
  $region6: #{basic_deconv_block_forward.2} parent=0 // loop_footer
    %s13 = sadd.s32 1, %s9
  $region7: #{basic_deconv_block_forward.2} parent=0 // loop_footer_branch
    %8 = sbr.rel target = $region3
  $region8: #{basic_deconv_block_forward.2} parent=0 // loop_exit
    _

// kernel: basic_deconv_block_forward.3
$region0: #{basic_deconv_block_forward.3}
  #allocation0 [shape = 'u32[]', space=smem, size = 0x4, offset = 0x4, fixed_abs, tag = 'smem constant byte address 0x4 - core index']
  #allocation1 [shape = 'u32[144,128]{1,0:T(1,128)}', space=vmem, size = 0x12000, scoped, tag = 'internal scratch']
  %s0 = inlined_call_operand.vmem [shape: bf16[2048,128], index: 0, kind: input, shape index: {}]
  %s1 = inlined_call_operand.vmem [shape: bf16[128,128], index: 1, kind: input, shape index: {}]
  %s2 = inlined_call_operand.vmem [shape: f32[1,128], index: 2, kind: input, shape index: {}]
  %s3 = inlined_call_operand.vmem [shape: f32[2048,128], index: 3, kind: output, shape index: {}]
  %s4 = sld [smem:[#allocation0]]
  $region45: #{basic_deconv_block_forward.3} parent=0
    _
  %s6 = ssub.s32 1, %s4
  %s7 = scalar_select 0, %s6, %s4
  loop: start=0, step=1, limit=6
  $region2: #{basic_deconv_block_forward.3} parent=0 // loop_pre_header
    _
  $region3: #{basic_deconv_block_forward.3} parent=0 // loop_header
    %s9 = sphi 0, %s13
    %p10 = scmp.ge.s32.totalorder %s9, 6
    %s19 = sphi 0, %s21
    %s22 = sphi 0, %s19
    %s23 = sphi 0, %s22
    %s39 = sphi 0, %s23
    %s43 = sphi 0, %s43
    %s45 = sphi 0, %s43
    %s46 = sphi 0, %s45
    %s60 = sphi 0, %s46
    %s64 = sphi 0, %s64
    %s66 = sphi 0, %s64
    %s67 = sphi 0, %s66
    %s81 = sphi 0, %s67
    %s87 = sphi 0, %s89
    %s90 = sphi 0, %s87
    %s91 = sphi 0, %s90
    %s107 = sphi 0, %s91
  $region4: #{basic_deconv_block_forward.3} parent=0 // loop_header_branch
    %12 = sbr.rel (%p10) target = $region8
  $region5: #{basic_deconv_block_forward.3} parent=0 // loop_body
    %s14 = ssub.s32 %s9, 1
    %s15 = ssub.s32 %s9, 2
    %s16 = sadd.s32 %s9, 1
    %s17 = ssub.s32 %s9, %s16
    %p18 = scmp.eq.s32.totalorder %s17, 0
    %s20 = sadd.s32 %s19, 1
    %s21 = scalar_select %p18, %s19, %s20
    %p24 = pneg %p18
    %p25 = scmp.eq.s32.totalorder %s9, 3
    %p26 = por %p24, %p25
    %p27 = scmp.ne.s32.totalorder %s19, %s22
    %p28 = scmp.eq.s32.totalorder %s9, 0
    %p29 = por %p27, %p28
    %p30 = scmp.ne.s32.totalorder %s19, %s22
    %p31 = scmp.eq.s32.totalorder %s14, 3
    %p32 = por %p30, %p31
    %p33 = scmp.ne.s32.totalorder %s22, %s23
    %p34 = scmp.eq.s32.totalorder %s14, 0
    %p35 = por %p33, %p34
    %p36 = scmp.ne.s32.totalorder %s22, %s23
    %p37 = scmp.eq.s32.totalorder %s15, 3
    %p38 = por %p36, %p37
    %p40 = scmp.ne.s32.totalorder %s23, %s39
    %p41 = scmp.eq.s32.totalorder %s15, 0
    %p42 = por %p40, %p41
    %s44 = sadd.s32 %s43, 1
    %p47 = scmp.eq.s32.totalorder %s9, 3
    %p48 = scmp.ne.s32.totalorder %s43, %s45
    %p49 = scmp.eq.s32.totalorder %s9, 0
    %p50 = por %p48, %p49
    %p51 = scmp.ne.s32.totalorder %s43, %s45
    %p52 = scmp.eq.s32.totalorder %s14, 3
    %p53 = por %p51, %p52
    %p54 = scmp.ne.s32.totalorder %s45, %s46
    %p55 = scmp.eq.s32.totalorder %s14, 0
    %p56 = por %p54, %p55
    %p57 = scmp.ne.s32.totalorder %s45, %s46
    %p58 = scmp.eq.s32.totalorder %s15, 3
    %p59 = por %p57, %p58
    %p61 = scmp.ne.s32.totalorder %s46, %s60
    %p62 = scmp.eq.s32.totalorder %s15, 0
    %p63 = por %p61, %p62
    %s65 = sadd.s32 %s64, 1
    %p68 = scmp.eq.s32.totalorder %s9, 3
    %p69 = scmp.ne.s32.totalorder %s64, %s66
    %p70 = scmp.eq.s32.totalorder %s9, 0
    %p71 = por %p69, %p70
    %p72 = scmp.ne.s32.totalorder %s64, %s66
    %p73 = scmp.eq.s32.totalorder %s14, 3
    %p74 = por %p72, %p73
    %p75 = scmp.ne.s32.totalorder %s66, %s67
    %p76 = scmp.eq.s32.totalorder %s14, 0
    %p77 = por %p75, %p76
    %p78 = scmp.ne.s32.totalorder %s66, %s67
    %p79 = scmp.eq.s32.totalorder %s15, 3
    %p80 = por %p78, %p79
    %p82 = scmp.ne.s32.totalorder %s67, %s81
    %p83 = scmp.eq.s32.totalorder %s15, 0
    %p84 = por %p82, %p83
    %s85 = ssub.s32 %s9, %s16
    %p86 = scmp.eq.s32.totalorder %s85, 0
    %s88 = sadd.s32 %s87, 1
    %s89 = scalar_select %p86, %s87, %s88
    %p92 = pneg %p86
    %p93 = scmp.eq.s32.totalorder %s9, 3
    %p94 = por %p92, %p93
    %p95 = scmp.ne.s32.totalorder %s87, %s90
    %p96 = scmp.eq.s32.totalorder %s9, 0
    %p97 = por %p95, %p96
    %p98 = scmp.ne.s32.totalorder %s87, %s90
    %p99 = scmp.eq.s32.totalorder %s14, 3
    %p100 = por %p98, %p99
    %p101 = scmp.ne.s32.totalorder %s90, %s91
    %p102 = scmp.eq.s32.totalorder %s14, 0
    %p103 = por %p101, %p102
    %p104 = scmp.ne.s32.totalorder %s90, %s91
    %p105 = scmp.eq.s32.totalorder %s15, 3
    %p106 = por %p104, %p105
    %p108 = scmp.ne.s32.totalorder %s91, %s107
    %p109 = scmp.eq.s32.totalorder %s15, 0
    %p110 = por %p108, %p109
    %p111 = scmp.le.s32.totalorder 1, %s9
    %p112 = scmp.lt.s32.totalorder %s9, 5
    %p113 = pnand %p111, %p112
    %p114 = pneg %p113
    // Predicated region
    $region9: #{basic_deconv_block_forward.3} parent=5 // pred_check
      _
    $region10: #{basic_deconv_block_forward.3} parent=5 // pred_check_branch
      %116 = sbr.rel (%p113) target = $region12
    $region11: #{basic_deconv_block_forward.3} parent=5 // pred_region
      %s117 = ssub.s32 %s9, 1
      // Predicated region
      $region13: #{basic_deconv_block_forward.3} parent=11 // pred_check
        %p118 = pneg %p56
      $region14: #{basic_deconv_block_forward.3} parent=11 // pred_check_branch
        %120 = sbr.rel (%p118) target = $region16
      $region15: #{basic_deconv_block_forward.3} parent=11 // pred_region
        _
      $region16: #{basic_deconv_block_forward.3} parent=11 // pred_fallthru
        _
      // Predicated region
      $region17: #{basic_deconv_block_forward.3} parent=11 // pred_check
        %p121 = pneg %p77
      $region18: #{basic_deconv_block_forward.3} parent=11 // pred_check_branch
        %123 = sbr.rel (%p121) target = $region20
      $region19: #{basic_deconv_block_forward.3} parent=11 // pred_region
        _
      $region20: #{basic_deconv_block_forward.3} parent=11 // pred_fallthru
        _
    $region12: #{basic_deconv_block_forward.3} parent=5 // pred_fallthru
      _
    %p124 = scmp.lt.s32.totalorder %s9, 4
    // Predicated region
    $region21: #{basic_deconv_block_forward.3} parent=5 // pred_check
      %p125 = pneg %p124
    $region22: #{basic_deconv_block_forward.3} parent=5 // pred_check_branch
      %127 = sbr.rel (%p125) target = $region24
    $region23: #{basic_deconv_block_forward.3} parent=5 // pred_region
      // Predicated region
      $region25: #{basic_deconv_block_forward.3} parent=23 // pred_check
        %p128 = pneg %p29
      $region26: #{basic_deconv_block_forward.3} parent=23 // pred_check_branch
        %130 = sbr.rel (%p128) target = $region28
      $region27: #{basic_deconv_block_forward.3} parent=23 // pred_region
        %s131 = smul.u32 64, %s9
        %p132 = scmp.lt.s32.totalorder %s131, 255
        %s133 = scalar_select %p132, %s131, 255
        %s134 = smul.addr %s133, 4
        %s135 = scalar_lea.vmem %s0, %s134
        %s136 = smul.u32 64, %s9
      $region28: #{basic_deconv_block_forward.3} parent=23 // pred_fallthru
        _
    $region24: #{basic_deconv_block_forward.3} parent=5 // pred_fallthru
      _
    %p137 = scmp.le.s32.totalorder 1, %s9
    %p138 = scmp.lt.s32.totalorder %s9, 5
    %p139 = pnand %p137, %p138
    %p140 = pneg %p139
    // Predicated region
    $region29: #{basic_deconv_block_forward.3} parent=5 // pred_check
      _
    $region30: #{basic_deconv_block_forward.3} parent=5 // pred_check_branch
      %142 = sbr.rel (%p139) target = $region32
    $region31: #{basic_deconv_block_forward.3} parent=5 // pred_region
      %s143 = ssub.s32 %s9, 1
      %s144 = smul.u32 64, %s14
      %p145 = scmp.lt.s32.totalorder %s144, 255
      %s146 = scalar_select %p145, %s144, 255
      %s147 = smul.addr %s146, 4
      %s148 = scalar_lea.vmem %s0, %s147
      %p149 = pneg %p35
      %p150 = pneg %p32
      %p151 = pneg %p56
      %p152 = pneg %p53
      %p153 = pneg %p77
      %p154 = pneg %p74
      %p155 = pneg %p103
      %p156 = pneg %p100
      %s157 = smul.u32 64, %s14
      %p158 = scmp.lt.s32.totalorder %s157, 255
      %s159 = scalar_select %p158, %s157, 255
      %s160 = smul.addr %s159, 8
      %s161 = scalar_lea.vmem %s3, %s160
      %s162 = smul.u32 64, %s14
      %p163 = scmp.lt.s32.totalorder %s162, 255
      %s164 = scalar_select %p163, %s162, 255
      %s165 = smul.addr %s164, 4
      %s166 = scalar_lea.vmem %s0, %s165
      %s167 = smul.u32 64, %s14
      %s168 = smul.u32 64, %s14
      %p169 = scmp.lt.s32.totalorder %s168, 255
      %s170 = scalar_select %p169, %s168, 255
      %s171 = smul.addr %s170, 8
      %s172 = scalar_lea.vmem %s3, %s171
      %s173 = smul.u32 64, %s14
      %v175 = vld [vmem:[%s166] sm:$0xf]
      %v176 = vld [vmem:[%s166 + $0x4] sm:$0xf]
      %v177 = vld [vmem:[%s166 + $0x8] sm:$0xf]
      %v178 = vld [vmem:[%s166 + $0xc] sm:$0xf]
      %v179 = vld [vmem:[%s166 + $0x10] sm:$0xf]
      %v180 = vld [vmem:[%s166 + $0x14] sm:$0xf]
      %v181 = vld [vmem:[%s166 + $0x18] sm:$0xf]
      %v182 = vld [vmem:[%s166 + $0x1c] sm:$0xf]
      %v183 = vld [vmem:[%s166 + $0x20] sm:$0xf]
      %v184 = vld [vmem:[%s166 + $0x24] sm:$0xf]
      %v185 = vld [vmem:[%s166 + $0x28] sm:$0xf]
      %v186 = vld [vmem:[%s166 + $0x2c] sm:$0xf]
      %v187 = vld [vmem:[%s166 + $0x30] sm:$0xf]
      %v188 = vld [vmem:[%s166 + $0x34] sm:$0xf]
      %v189 = vld [vmem:[%s166 + $0x38] sm:$0xf]
      %v190 = vld [vmem:[%s166 + $0x3c] sm:$0xf]
      %v191 = vld [vmem:[%s166 + $0x40] sm:$0xf]
      %v192 = vld [vmem:[%s166 + $0x44] sm:$0xf]
      %v193 = vld [vmem:[%s166 + $0x48] sm:$0xf]
      %v194 = vld [vmem:[%s166 + $0x4c] sm:$0xf]
      %v195 = vld [vmem:[%s166 + $0x50] sm:$0xf]
      %v196 = vld [vmem:[%s166 + $0x54] sm:$0xf]
      %v197 = vld [vmem:[%s166 + $0x58] sm:$0xf]
      %v198 = vld [vmem:[%s166 + $0x5c] sm:$0xf]
      %v199 = vld [vmem:[%s166 + $0x60] sm:$0xf]
      %v200 = vld [vmem:[%s166 + $0x64] sm:$0xf]
      %v201 = vld [vmem:[%s166 + $0x68] sm:$0xf]
      %v202 = vld [vmem:[%s166 + $0x6c] sm:$0xf]
      %v203 = vld [vmem:[%s166 + $0x70] sm:$0xf]
      %v204 = vld [vmem:[%s166 + $0x74] sm:$0xf]
      %v205 = vld [vmem:[%s166 + $0x78] sm:$0xf]
      %v206 = vld [vmem:[%s166 + $0x7c] sm:$0xf]
      %v207 = vld [vmem:[%s166 + $0x80] sm:$0xf]
      %v208 = vld [vmem:[%s166 + $0x84] sm:$0xf]
      %v209 = vld [vmem:[%s166 + $0x88] sm:$0xf]
      %v210 = vld [vmem:[%s166 + $0x8c] sm:$0xf]
      %v211 = vld [vmem:[%s166 + $0x90] sm:$0xf]
      %v212 = vld [vmem:[%s166 + $0x94] sm:$0xf]
      %v213 = vld [vmem:[%s166 + $0x98] sm:$0xf]
      %v214 = vld [vmem:[%s166 + $0x9c] sm:$0xf]
      %v215 = vld [vmem:[%s166 + $0xa0] sm:$0xf]
      %v216 = vld [vmem:[%s166 + $0xa4] sm:$0xf]
      %v217 = vld [vmem:[%s166 + $0xa8] sm:$0xf]
      %v218 = vld [vmem:[%s166 + $0xac] sm:$0xf]
      %v219 = vld [vmem:[%s166 + $0xb0] sm:$0xf]
      %v220 = vld [vmem:[%s166 + $0xb4] sm:$0xf]
      %v221 = vld [vmem:[%s166 + $0xb8] sm:$0xf]
      %v222 = vld [vmem:[%s166 + $0xbc] sm:$0xf]
      %v223 = vld [vmem:[%s166 + $0xc0] sm:$0xf]
      %v224 = vld [vmem:[%s166 + $0xc4] sm:$0xf]
      %v225 = vld [vmem:[%s166 + $0xc8] sm:$0xf]
      %v226 = vld [vmem:[%s166 + $0xcc] sm:$0xf]
      %v227 = vld [vmem:[%s166 + $0xd0] sm:$0xf]
      %v228 = vld [vmem:[%s166 + $0xd4] sm:$0xf]
      %v229 = vld [vmem:[%s166 + $0xd8] sm:$0xf]
      %v230 = vld [vmem:[%s166 + $0xdc] sm:$0xf]
      %v231 = vld [vmem:[%s166 + $0xe0] sm:$0xf]
      %v232 = vld [vmem:[%s166 + $0xe4] sm:$0xf]
      %v233 = vld [vmem:[%s166 + $0xe8] sm:$0xf]
      %v234 = vld [vmem:[%s166 + $0xec] sm:$0xf]
      %v235 = vld [vmem:[%s166 + $0xf0] sm:$0xf]
      %v236 = vld [vmem:[%s166 + $0xf4] sm:$0xf]
      %v237 = vld [vmem:[%s166 + $0xf8] sm:$0xf]
      %v238 = vld [vmem:[%s166 + $0xfc] sm:$0xf]
      %v239 = vld [vmem:[%s1] sm:$0xf]
      %v240 = vld [vmem:[%s1 + $0x4] sm:$0xf]
      %v241 = vld [vmem:[%s1 + $0x8] sm:$0xf]
      %v242 = vld [vmem:[%s1 + $0xc] sm:$0xf]
      %v243 = vld [vmem:[%s1 + $0x10] sm:$0xf]
      %v244 = vld [vmem:[%s1 + $0x14] sm:$0xf]
      %v245 = vld [vmem:[%s1 + $0x18] sm:$0xf]
      %v246 = vld [vmem:[%s1 + $0x1c] sm:$0xf]
      %v247 = vld [vmem:[%s1 + $0x20] sm:$0xf]
      %v248 = vld [vmem:[%s1 + $0x24] sm:$0xf]
      %v249 = vld [vmem:[%s1 + $0x28] sm:$0xf]
      %v250 = vld [vmem:[%s1 + $0x2c] sm:$0xf]
      %v251 = vld [vmem:[%s1 + $0x30] sm:$0xf]
      %v252 = vld [vmem:[%s1 + $0x34] sm:$0xf]
      %v253 = vld [vmem:[%s1 + $0x38] sm:$0xf]
      %v254 = vld [vmem:[%s1 + $0x3c] sm:$0xf]
      %v255 = vld [vmem:[%s2] sm:$0x1]
      %v257 = vlaneseq
      %v258 = vshrl.u32 %v257, 7
      %v259 = vsub.s32 0, %v258
      %v260 = vrot.slane %v255, %v259
      %v326 = vunpack.c.l.b16 %v175
      %v327 = vunpack.c.l.b16 %v176
      %v328 = vunpack.c.l.b16 %v177
      %v329 = vunpack.c.l.b16 %v178
      %v330 = vunpack.c.l.b16 %v179
      %v331 = vunpack.c.l.b16 %v180
      %v332 = vunpack.c.l.b16 %v181
      %v333 = vunpack.c.l.b16 %v182
      %v334 = vunpack.c.l.b16 %v183
      %v335 = vunpack.c.l.b16 %v184
      %v336 = vunpack.c.l.b16 %v185
      %v337 = vunpack.c.l.b16 %v186
      %v338 = vunpack.c.l.b16 %v187
      %v339 = vunpack.c.l.b16 %v188
      %v340 = vunpack.c.l.b16 %v189
      %v341 = vunpack.c.l.b16 %v190
      %v342 = vunpack.c.l.b16 %v191
      %v343 = vunpack.c.l.b16 %v192
      %v344 = vunpack.c.l.b16 %v193
      %v345 = vunpack.c.l.b16 %v194
      %v346 = vunpack.c.l.b16 %v195
      %v347 = vunpack.c.l.b16 %v196
      %v348 = vunpack.c.l.b16 %v197
      %v349 = vunpack.c.l.b16 %v198
      %v350 = vunpack.c.l.b16 %v199
      %v351 = vunpack.c.l.b16 %v200
      %v352 = vunpack.c.l.b16 %v201
      %v353 = vunpack.c.l.b16 %v202
      %v354 = vunpack.c.l.b16 %v203
      %v355 = vunpack.c.l.b16 %v204
      %v356 = vunpack.c.l.b16 %v205
      %v357 = vunpack.c.l.b16 %v206
      %v358 = vunpack.c.l.b16 %v207
      %v359 = vunpack.c.l.b16 %v208
      %v360 = vunpack.c.l.b16 %v209
      %v361 = vunpack.c.l.b16 %v210
      %v362 = vunpack.c.l.b16 %v211
      %v363 = vunpack.c.l.b16 %v212
      %v364 = vunpack.c.l.b16 %v213
      %v365 = vunpack.c.l.b16 %v214
      %v366 = vunpack.c.l.b16 %v215
      %v367 = vunpack.c.l.b16 %v216
      %v368 = vunpack.c.l.b16 %v217
      %v369 = vunpack.c.l.b16 %v218
      %v370 = vunpack.c.l.b16 %v219
      %v371 = vunpack.c.l.b16 %v220
      %v372 = vunpack.c.l.b16 %v221
      %v373 = vunpack.c.l.b16 %v222
      %v374 = vunpack.c.l.b16 %v223
      %v375 = vunpack.c.l.b16 %v224
      %v376 = vunpack.c.l.b16 %v225
      %v377 = vunpack.c.l.b16 %v226
      %v378 = vunpack.c.l.b16 %v227
      %v379 = vunpack.c.l.b16 %v228
      %v380 = vunpack.c.l.b16 %v229
      %v381 = vunpack.c.l.b16 %v230
      %v382 = vunpack.c.l.b16 %v231
      %v383 = vunpack.c.l.b16 %v232
      %v384 = vunpack.c.l.b16 %v233
      %v385 = vunpack.c.l.b16 %v234
      %v386 = vunpack.c.l.b16 %v235
      %v387 = vunpack.c.l.b16 %v236
      %v388 = vunpack.c.l.b16 %v237
      %v389 = vunpack.c.l.b16 %v238
      %v390 = vpack.c.b16 %v327, %v326
      %v391 = vpack.c.b16 %v329, %v328
      %v392 = vpack.c.b16 %v331, %v330
      %v393 = vpack.c.b16 %v333, %v332
      %v394 = vpack.c.b16 %v335, %v334
      %v395 = vpack.c.b16 %v337, %v336
      %v396 = vpack.c.b16 %v339, %v338
      %v397 = vpack.c.b16 %v341, %v340
      %v398 = vpack.c.b16 %v343, %v342
      %v399 = vpack.c.b16 %v345, %v344
      %v400 = vpack.c.b16 %v347, %v346
      %v401 = vpack.c.b16 %v349, %v348
      %v402 = vpack.c.b16 %v351, %v350
      %v403 = vpack.c.b16 %v353, %v352
      %v404 = vpack.c.b16 %v355, %v354
      %v405 = vpack.c.b16 %v357, %v356
      %v406 = vpack.c.b16 %v359, %v358
      %v407 = vpack.c.b16 %v361, %v360
      %v408 = vpack.c.b16 %v363, %v362
      %v409 = vpack.c.b16 %v365, %v364
      %v410 = vpack.c.b16 %v367, %v366
      %v411 = vpack.c.b16 %v369, %v368
      %v412 = vpack.c.b16 %v371, %v370
      %v413 = vpack.c.b16 %v373, %v372
      %v414 = vpack.c.b16 %v375, %v374
      %v415 = vpack.c.b16 %v377, %v376
      %v416 = vpack.c.b16 %v379, %v378
      %v417 = vpack.c.b16 %v381, %v380
      %v418 = vpack.c.b16 %v383, %v382
      %v419 = vpack.c.b16 %v385, %v384
      %v420 = vpack.c.b16 %v387, %v386
      %v421 = vpack.c.b16 %v389, %v388
      %v470 = vunpack.c.l.b16 %v239
      %v471 = vunpack.c.l.b16 %v240
      %v472 = vunpack.c.l.b16 %v241
      %v473 = vunpack.c.l.b16 %v242
      %v474 = vunpack.c.l.b16 %v243
      %v475 = vunpack.c.l.b16 %v244
      %v476 = vunpack.c.l.b16 %v245
      %v477 = vunpack.c.l.b16 %v246
      %v478 = vunpack.c.l.b16 %v247
      %v479 = vunpack.c.l.b16 %v248
      %v480 = vunpack.c.l.b16 %v249
      %v481 = vunpack.c.l.b16 %v250
      %v482 = vunpack.c.l.b16 %v251
      %v483 = vunpack.c.l.b16 %v252
      %v484 = vunpack.c.l.b16 %v253
      %v485 = vunpack.c.l.b16 %v254
      %v486 = vpack.c.b16 %v471, %v470
      %v487 = vpack.c.b16 %v473, %v472
      %v488 = vpack.c.b16 %v475, %v474
      %v489 = vpack.c.b16 %v477, %v476
      %v490 = vpack.c.b16 %v479, %v478
      %v491 = vpack.c.b16 %v481, %v480
      %v492 = vpack.c.b16 %v483, %v482
      %v493 = vpack.c.b16 %v485, %v484
      %502 = vmatprep.subr.bf16.mxu0 0
      %503 = vmatpush1.bf16.msra.mxu0 %v486
      %504 = vmatprep.subr.bf16.mxu0 0
      %505 = vmatpush1.bf16.msra.mxu0 %v487
      %506 = vmatprep.subr.bf16.mxu0 0
      %507 = vmatpush1.bf16.msra.mxu0 %v488
      %508 = vmatprep.subr.bf16.mxu0 0
      %509 = vmatpush1.bf16.msra.mxu0 %v489
      %510 = vmatprep.subr.bf16.mxu0 0
      %511 = vmatpush1.bf16.msra.mxu0 %v490
      %512 = vmatprep.subr.bf16.mxu0 0
      %513 = vmatpush1.bf16.msra.mxu0 %v491
      %514 = vmatprep.subr.bf16.mxu0 0
      %515 = vmatpush1.bf16.msra.mxu0 %v492
      %516 = vmatprep.subr.bf16.mxu0 0
      %517 = vmatpush1.bf16.msra.mxu0 %v493
      %518 = vmatprep.subr.bf16.mxu0 0
      %519 = vmatpush1.bf16.msra.mxu0 0
      %520 = vmatprep.subr.bf16.mxu0 0
      %521 = vmatpush1.bf16.msra.mxu0 0
      %522 = vmatprep.subr.bf16.mxu0 0
      %523 = vmatpush1.bf16.msra.mxu0 0
      %524 = vmatprep.subr.bf16.mxu0 0
      %525 = vmatpush1.bf16.msra.mxu0 0
      %526 = vmatprep.subr.bf16.mxu0 0
      %527 = vmatpush1.bf16.msra.mxu0 0
      %528 = vmatprep.subr.bf16.mxu0 0
      %529 = vmatpush1.bf16.msra.mxu0 0
      %530 = vmatprep.subr.bf16.mxu0 0
      %531 = vmatpush1.bf16.msra.mxu0 0
      %532 = vmatprep.subr.bf16.mxu0 0
      %533 = vmatpush1.bf16.msra.mxu0 0
      %534 = vmatprep.mubr.bf16.mxu0 0
      %535 = vmatmul.mubr.bf16.gmra.mrb[0].mxu0 %v390
      %v536 = vpop.f32.mrb[0].mxu0
      %v537 = vadd.f32 %v260, %v536
      %v538 = vpop.f32.mrb[0].mxu0
      %v539 = vpop.f32.mrb[0].mxu0
      %v540 = vadd.f32 %v260, %v539
      %v541 = vpop.f32.mrb[0].mxu0
      %542 = vmatprep.mubr.bf16.mxu0 0
      %543 = vmatmul.mubr.bf16.gmra.mrb[0].mxu0 %v391
      %v544 = vpop.f32.mrb[0].mxu0
      %v545 = vadd.f32 %v260, %v544
      %v546 = vpop.f32.mrb[0].mxu0
      %v547 = vpop.f32.mrb[0].mxu0
      %v548 = vadd.f32 %v260, %v547
      %v549 = vpop.f32.mrb[0].mxu0
      %550 = vmatprep.mubr.bf16.mxu0 0
      %551 = vmatmul.mubr.bf16.gmra.mrb[0].mxu0 %v392
      %v552 = vpop.f32.mrb[0].mxu0
      %v553 = vadd.f32 %v260, %v552
      %v554 = vpop.f32.mrb[0].mxu0
      %v555 = vpop.f32.mrb[0].mxu0
      %v556 = vadd.f32 %v260, %v555
      %v557 = vpop.f32.mrb[0].mxu0
      %558 = vmatprep.mubr.bf16.mxu0 0
      %559 = vmatmul.mubr.bf16.gmra.mrb[0].mxu0 %v393
      %v560 = vpop.f32.mrb[0].mxu0
      %v561 = vadd.f32 %v260, %v560
      %v562 = vpop.f32.mrb[0].mxu0
      %v563 = vpop.f32.mrb[0].mxu0
      %v564 = vadd.f32 %v260, %v563
      %v565 = vpop.f32.mrb[0].mxu0
      %566 = vmatprep.mubr.bf16.mxu0 0
      %567 = vmatmul.mubr.bf16.gmra.mrb[0].mxu0 %v394
      %v568 = vpop.f32.mrb[0].mxu0
      %v569 = vadd.f32 %v260, %v568
      %v570 = vpop.f32.mrb[0].mxu0
      %v571 = vpop.f32.mrb[0].mxu0
      %v572 = vadd.f32 %v260, %v571
      %v573 = vpop.f32.mrb[0].mxu0
      %574 = vmatprep.mubr.bf16.mxu0 0
      %575 = vmatmul.mubr.bf16.gmra.mrb[0].mxu0 %v395
      %v576 = vpop.f32.mrb[0].mxu0
      %v577 = vadd.f32 %v260, %v576
      %v578 = vpop.f32.mrb[0].mxu0
      %v579 = vpop.f32.mrb[0].mxu0
      %v580 = vadd.f32 %v260, %v579
      %v581 = vpop.f32.mrb[0].mxu0
      %582 = vmatprep.mubr.bf16.mxu0 0
      %583 = vmatmul.mubr.bf16.gmra.mrb[0].mxu0 %v396
      %v584 = vpop.f32.mrb[0].mxu0
      %v585 = vadd.f32 %v260, %v584
      %v586 = vpop.f32.mrb[0].mxu0
      %v587 = vpop.f32.mrb[0].mxu0
      %v588 = vadd.f32 %v260, %v587
      %v589 = vpop.f32.mrb[0].mxu0
      %590 = vmatprep.mubr.bf16.mxu0 0
      %591 = vmatmul.mubr.bf16.gmra.mrb[0].mxu0 %v397
      %v592 = vpop.f32.mrb[0].mxu0
      %v593 = vadd.f32 %v260, %v592
      %v594 = vpop.f32.mrb[0].mxu0
      %v595 = vpop.f32.mrb[0].mxu0
      %v596 = vadd.f32 %v260, %v595
      %v597 = vpop.f32.mrb[0].mxu0
      %598 = vmatprep.mubr.bf16.mxu0 0
      %599 = vmatmul.mubr.bf16.gmra.mrb[0].mxu0 %v398
      %v600 = vpop.f32.mrb[0].mxu0
      %v601 = vadd.f32 %v260, %v600
      %v602 = vpop.f32.mrb[0].mxu0
      %v603 = vpop.f32.mrb[0].mxu0
      %v604 = vadd.f32 %v260, %v603
      %v605 = vpop.f32.mrb[0].mxu0
      %606 = vmatprep.mubr.bf16.mxu0 0
      %607 = vmatmul.mubr.bf16.gmra.mrb[0].mxu0 %v399
      %v608 = vpop.f32.mrb[0].mxu0
      %v609 = vadd.f32 %v260, %v608
      %v610 = vpop.f32.mrb[0].mxu0
      %v611 = vpop.f32.mrb[0].mxu0
      %v612 = vadd.f32 %v260, %v611
      %v613 = vpop.f32.mrb[0].mxu0
      %614 = vmatprep.mubr.bf16.mxu0 0
      %615 = vmatmul.mubr.bf16.gmra.mrb[0].mxu0 %v400
      %v616 = vpop.f32.mrb[0].mxu0
      %v617 = vadd.f32 %v260, %v616
      %v618 = vpop.f32.mrb[0].mxu0
      %v619 = vpop.f32.mrb[0].mxu0
      %v620 = vadd.f32 %v260, %v619
      %v621 = vpop.f32.mrb[0].mxu0
      %622 = vmatprep.mubr.bf16.mxu0 0
      %623 = vmatmul.mubr.bf16.gmra.mrb[0].mxu0 %v401
      %v624 = vpop.f32.mrb[0].mxu0
      %v625 = vadd.f32 %v260, %v624
      %v626 = vpop.f32.mrb[0].mxu0
      %v627 = vpop.f32.mrb[0].mxu0
      %v628 = vadd.f32 %v260, %v627
      %v629 = vpop.f32.mrb[0].mxu0
      %630 = vmatprep.mubr.bf16.mxu0 0
      %631 = vmatmul.mubr.bf16.gmra.mrb[0].mxu0 %v402
      %v632 = vpop.f32.mrb[0].mxu0
      %v633 = vadd.f32 %v260, %v632
      %v634 = vpop.f32.mrb[0].mxu0
      %v635 = vpop.f32.mrb[0].mxu0
      %v636 = vadd.f32 %v260, %v635
      %v637 = vpop.f32.mrb[0].mxu0
      %638 = vmatprep.mubr.bf16.mxu0 0
      %639 = vmatmul.mubr.bf16.gmra.mrb[0].mxu0 %v403
      %v640 = vpop.f32.mrb[0].mxu0
      %v641 = vadd.f32 %v260, %v640
      %v642 = vpop.f32.mrb[0].mxu0
      %v643 = vpop.f32.mrb[0].mxu0
      %v644 = vadd.f32 %v260, %v643
      %v645 = vpop.f32.mrb[0].mxu0
      %646 = vmatprep.mubr.bf16.mxu0 0
      %647 = vmatmul.mubr.bf16.gmra.mrb[0].mxu0 %v404
      %v648 = vpop.f32.mrb[0].mxu0
      %v649 = vadd.f32 %v260, %v648
      %v650 = vpop.f32.mrb[0].mxu0
      %v651 = vpop.f32.mrb[0].mxu0
      %v652 = vadd.f32 %v260, %v651
      %v653 = vpop.f32.mrb[0].mxu0
      %654 = vmatprep.mubr.bf16.mxu0 0
      %655 = vmatmul.mubr.bf16.gmra.mrb[0].mxu0 %v405
      %v656 = vpop.f32.mrb[0].mxu0
      %v657 = vadd.f32 %v260, %v656
      %v658 = vpop.f32.mrb[0].mxu0
      %v659 = vpop.f32.mrb[0].mxu0
      %v660 = vadd.f32 %v260, %v659
      %v661 = vpop.f32.mrb[0].mxu0
      %662 = vmatprep.mubr.bf16.mxu0 0
      %663 = vmatmul.mubr.bf16.gmra.mrb[0].mxu0 %v406
      %v664 = vpop.f32.mrb[0].mxu0
      %v665 = vadd.f32 %v260, %v664
      %v666 = vpop.f32.mrb[0].mxu0
      %v667 = vpop.f32.mrb[0].mxu0
      %v668 = vadd.f32 %v260, %v667
      %v669 = vpop.f32.mrb[0].mxu0
      %670 = vmatprep.mubr.bf16.mxu0 0
      %671 = vmatmul.mubr.bf16.gmra.mrb[0].mxu0 %v407
      %v672 = vpop.f32.mrb[0].mxu0
      %v673 = vadd.f32 %v260, %v672
      %v674 = vpop.f32.mrb[0].mxu0
      %v675 = vpop.f32.mrb[0].mxu0
      %v676 = vadd.f32 %v260, %v675
      %v677 = vpop.f32.mrb[0].mxu0
      %678 = vmatprep.mubr.bf16.mxu0 0
      %679 = vmatmul.mubr.bf16.gmra.mrb[0].mxu0 %v408
      %v680 = vpop.f32.mrb[0].mxu0
      %v681 = vadd.f32 %v260, %v680
      %v682 = vpop.f32.mrb[0].mxu0
      %v683 = vpop.f32.mrb[0].mxu0
      %v684 = vadd.f32 %v260, %v683
      %v685 = vpop.f32.mrb[0].mxu0
      %686 = vmatprep.mubr.bf16.mxu0 0
      %687 = vmatmul.mubr.bf16.gmra.mrb[0].mxu0 %v409
      %v688 = vpop.f32.mrb[0].mxu0
      %v689 = vadd.f32 %v260, %v688
      %v690 = vpop.f32.mrb[0].mxu0
      %v691 = vpop.f32.mrb[0].mxu0
      %v692 = vadd.f32 %v260, %v691
      %v693 = vpop.f32.mrb[0].mxu0
      %694 = vmatprep.mubr.bf16.mxu0 0
      %695 = vmatmul.mubr.bf16.gmra.mrb[0].mxu0 %v410
      %v696 = vpop.f32.mrb[0].mxu0
      %v697 = vadd.f32 %v260, %v696
      %v698 = vpop.f32.mrb[0].mxu0
      %v699 = vpop.f32.mrb[0].mxu0
      %v700 = vadd.f32 %v260, %v699
      %v701 = vpop.f32.mrb[0].mxu0
      %702 = vmatprep.mubr.bf16.mxu0 0
      %703 = vmatmul.mubr.bf16.gmra.mrb[0].mxu0 %v411
      %v704 = vpop.f32.mrb[0].mxu0
      %v705 = vadd.f32 %v260, %v704
      %v706 = vpop.f32.mrb[0].mxu0
      %v707 = vpop.f32.mrb[0].mxu0
      %v708 = vadd.f32 %v260, %v707
      %v709 = vpop.f32.mrb[0].mxu0
      %710 = vmatprep.mubr.bf16.mxu0 0
      %711 = vmatmul.mubr.bf16.gmra.mrb[0].mxu0 %v412
      %v712 = vpop.f32.mrb[0].mxu0
      %v713 = vadd.f32 %v260, %v712
      %v714 = vpop.f32.mrb[0].mxu0
      %v715 = vpop.f32.mrb[0].mxu0
      %v716 = vadd.f32 %v260, %v715
      %v717 = vpop.f32.mrb[0].mxu0
      %718 = vmatprep.mubr.bf16.mxu0 0
      %719 = vmatmul.mubr.bf16.gmra.mrb[0].mxu0 %v413
      %v720 = vpop.f32.mrb[0].mxu0
      %v721 = vadd.f32 %v260, %v720
      %v722 = vpop.f32.mrb[0].mxu0
      %v723 = vpop.f32.mrb[0].mxu0
      %v724 = vadd.f32 %v260, %v723
      %v725 = vpop.f32.mrb[0].mxu0
      %726 = vmatprep.mubr.bf16.mxu0 0
      %727 = vmatmul.mubr.bf16.gmra.mrb[0].mxu0 %v414
      %v728 = vpop.f32.mrb[0].mxu0
      %v729 = vadd.f32 %v260, %v728
      %v730 = vpop.f32.mrb[0].mxu0
      %v731 = vpop.f32.mrb[0].mxu0
      %v732 = vadd.f32 %v260, %v731
      %v733 = vpop.f32.mrb[0].mxu0
      %734 = vmatprep.mubr.bf16.mxu0 0
      %735 = vmatmul.mubr.bf16.gmra.mrb[0].mxu0 %v415
      %v736 = vpop.f32.mrb[0].mxu0
      %v737 = vadd.f32 %v260, %v736
      %v738 = vpop.f32.mrb[0].mxu0
      %v739 = vpop.f32.mrb[0].mxu0
      %v740 = vadd.f32 %v260, %v739
      %v741 = vpop.f32.mrb[0].mxu0
      %742 = vmatprep.mubr.bf16.mxu0 0
      %743 = vmatmul.mubr.bf16.gmra.mrb[0].mxu0 %v416
      %v744 = vpop.f32.mrb[0].mxu0
      %v745 = vadd.f32 %v260, %v744
      %v746 = vpop.f32.mrb[0].mxu0
      %v747 = vpop.f32.mrb[0].mxu0
      %v748 = vadd.f32 %v260, %v747
      %v749 = vpop.f32.mrb[0].mxu0
      %750 = vmatprep.mubr.bf16.mxu0 0
      %751 = vmatmul.mubr.bf16.gmra.mrb[0].mxu0 %v417
      %v752 = vpop.f32.mrb[0].mxu0
      %v753 = vadd.f32 %v260, %v752
      %v754 = vpop.f32.mrb[0].mxu0
      %v755 = vpop.f32.mrb[0].mxu0
      %v756 = vadd.f32 %v260, %v755
      %v757 = vpop.f32.mrb[0].mxu0
      %758 = vmatprep.mubr.bf16.mxu0 0
      %759 = vmatmul.mubr.bf16.gmra.mrb[0].mxu0 %v418
      %v760 = vpop.f32.mrb[0].mxu0
      %v761 = vadd.f32 %v260, %v760
      %v762 = vpop.f32.mrb[0].mxu0
      %v763 = vpop.f32.mrb[0].mxu0
      %v764 = vadd.f32 %v260, %v763
      %v765 = vpop.f32.mrb[0].mxu0
      %766 = vmatprep.mubr.bf16.mxu0 0
      %767 = vmatmul.mubr.bf16.gmra.mrb[0].mxu0 %v419
      %v768 = vpop.f32.mrb[0].mxu0
      %v769 = vadd.f32 %v260, %v768
      %v770 = vpop.f32.mrb[0].mxu0
      %v771 = vpop.f32.mrb[0].mxu0
      %v772 = vadd.f32 %v260, %v771
      %v773 = vpop.f32.mrb[0].mxu0
      %774 = vmatprep.mubr.bf16.mxu0 0
      %775 = vmatmul.mubr.bf16.gmra.mrb[0].mxu0 %v420
      %v776 = vpop.f32.mrb[0].mxu0
      %v777 = vadd.f32 %v260, %v776
      %v778 = vpop.f32.mrb[0].mxu0
      %v779 = vpop.f32.mrb[0].mxu0
      %v780 = vadd.f32 %v260, %v779
      %v781 = vpop.f32.mrb[0].mxu0
      %782 = vmatprep.mubr.bf16.mxu0 0
      %783 = vmatmul.mubr.bf16.gmra.mrb[0].mxu0 %v421
      %v784 = vpop.f32.mrb[0].mxu0
      %v785 = vadd.f32 %v260, %v784
      %v786 = vpop.f32.mrb[0].mxu0
      %v787 = vpop.f32.mrb[0].mxu0
      %v788 = vadd.f32 %v260, %v787
      %v789 = vpop.f32.mrb[0].mxu0
      %790 = vdwg.mxu0
      %791 = vst [vmem:[%s172] sm:$0xff] %v537
      %792 = vst [vmem:[%s172 + $0x8] sm:$0xff] %v540
      %793 = vst [vmem:[%s172 + $0x10] sm:$0xff] %v545
      %794 = vst [vmem:[%s172 + $0x18] sm:$0xff] %v548
      %795 = vst [vmem:[%s172 + $0x20] sm:$0xff] %v553
      %796 = vst [vmem:[%s172 + $0x28] sm:$0xff] %v556
      %797 = vst [vmem:[%s172 + $0x30] sm:$0xff] %v561
      %798 = vst [vmem:[%s172 + $0x38] sm:$0xff] %v564
      %799 = vst [vmem:[%s172 + $0x40] sm:$0xff] %v569
      %800 = vst [vmem:[%s172 + $0x48] sm:$0xff] %v572
      %801 = vst [vmem:[%s172 + $0x50] sm:$0xff] %v577
      %802 = vst [vmem:[%s172 + $0x58] sm:$0xff] %v580
      %803 = vst [vmem:[%s172 + $0x60] sm:$0xff] %v585
      %804 = vst [vmem:[%s172 + $0x68] sm:$0xff] %v588
      %805 = vst [vmem:[%s172 + $0x70] sm:$0xff] %v593
      %806 = vst [vmem:[%s172 + $0x78] sm:$0xff] %v596
      %807 = vst [vmem:[%s172 + $0x80] sm:$0xff] %v601
      %808 = vst [vmem:[%s172 + $0x88] sm:$0xff] %v604
      %809 = vst [vmem:[%s172 + $0x90] sm:$0xff] %v609
      %810 = vst [vmem:[%s172 + $0x98] sm:$0xff] %v612
      %811 = vst [vmem:[%s172 + $0xa0] sm:$0xff] %v617
      %812 = vst [vmem:[%s172 + $0xa8] sm:$0xff] %v620
      %813 = vst [vmem:[%s172 + $0xb0] sm:$0xff] %v625
      %814 = vst [vmem:[%s172 + $0xb8] sm:$0xff] %v628
      %815 = vst [vmem:[%s172 + $0xc0] sm:$0xff] %v633
      %816 = vst [vmem:[%s172 + $0xc8] sm:$0xff] %v636
      %817 = vst [vmem:[%s172 + $0xd0] sm:$0xff] %v641
      %818 = vst [vmem:[%s172 + $0xd8] sm:$0xff] %v644
      %819 = vst [vmem:[%s172 + $0xe0] sm:$0xff] %v649
      %820 = vst [vmem:[%s172 + $0xe8] sm:$0xff] %v652
      %821 = vst [vmem:[%s172 + $0xf0] sm:$0xff] %v657
      %822 = vst [vmem:[%s172 + $0xf8] sm:$0xff] %v660
      %823 = vst [vmem:[%s172 + $0x100] sm:$0xff] %v665
      %824 = vst [vmem:[%s172 + $0x108] sm:$0xff] %v668
      %825 = vst [vmem:[%s172 + $0x110] sm:$0xff] %v673
      %826 = vst [vmem:[%s172 + $0x118] sm:$0xff] %v676
      %827 = vst [vmem:[%s172 + $0x120] sm:$0xff] %v681
      %828 = vst [vmem:[%s172 + $0x128] sm:$0xff] %v684
      %829 = vst [vmem:[%s172 + $0x130] sm:$0xff] %v689
      %830 = vst [vmem:[%s172 + $0x138] sm:$0xff] %v692
      %831 = vst [vmem:[%s172 + $0x140] sm:$0xff] %v697
      %832 = vst [vmem:[%s172 + $0x148] sm:$0xff] %v700
      %833 = vst [vmem:[%s172 + $0x150] sm:$0xff] %v705
      %834 = vst [vmem:[%s172 + $0x158] sm:$0xff] %v708
      %835 = vst [vmem:[%s172 + $0x160] sm:$0xff] %v713
      %836 = vst [vmem:[%s172 + $0x168] sm:$0xff] %v716
      %837 = vst [vmem:[%s172 + $0x170] sm:$0xff] %v721
      %838 = vst [vmem:[%s172 + $0x178] sm:$0xff] %v724
      %839 = vst [vmem:[%s172 + $0x180] sm:$0xff] %v729
      %840 = vst [vmem:[%s172 + $0x188] sm:$0xff] %v732
      %841 = vst [vmem:[%s172 + $0x190] sm:$0xff] %v737
      %842 = vst [vmem:[%s172 + $0x198] sm:$0xff] %v740
      %843 = vst [vmem:[%s172 + $0x1a0] sm:$0xff] %v745
      %844 = vst [vmem:[%s172 + $0x1a8] sm:$0xff] %v748
      %845 = vst [vmem:[%s172 + $0x1b0] sm:$0xff] %v753
      %846 = vst [vmem:[%s172 + $0x1b8] sm:$0xff] %v756
      %847 = vst [vmem:[%s172 + $0x1c0] sm:$0xff] %v761
      %848 = vst [vmem:[%s172 + $0x1c8] sm:$0xff] %v764
      %849 = vst [vmem:[%s172 + $0x1d0] sm:$0xff] %v769
      %850 = vst [vmem:[%s172 + $0x1d8] sm:$0xff] %v772
      %851 = vst [vmem:[%s172 + $0x1e0] sm:$0xff] %v777
      %852 = vst [vmem:[%s172 + $0x1e8] sm:$0xff] %v780
      %853 = vst [vmem:[%s172 + $0x1f0] sm:$0xff] %v785
      %854 = vst [vmem:[%s172 + $0x1f8] sm:$0xff] %v788
      %s855 = smul.u32 64, %s14
      %p856 = scmp.lt.s32.totalorder %s855, 255
      %s857 = scalar_select %p856, %s855, 255
      %s858 = smul.addr %s857, 8
      %s859 = scalar_lea.vmem %s3, %s858
      // Predicated region
      $region33: #{basic_deconv_block_forward.3} parent=31 // pred_check
        %p860 = pneg %p100
      $region34: #{basic_deconv_block_forward.3} parent=31 // pred_check_branch
        %862 = sbr.rel (%p860) target = $region36
      $region35: #{basic_deconv_block_forward.3} parent=31 // pred_region
        %s863 = smul.u32 64, %s14
      $region36: #{basic_deconv_block_forward.3} parent=31 // pred_fallthru
        _
    $region32: #{basic_deconv_block_forward.3} parent=5 // pred_fallthru
      _
    %p864 = scmp.le.s32.totalorder 2, %s9
    // Predicated region
    $region37: #{basic_deconv_block_forward.3} parent=5 // pred_check
      %p865 = pneg %p864
    $region38: #{basic_deconv_block_forward.3} parent=5 // pred_check_branch
      %867 = sbr.rel (%p865) target = $region40
    $region39: #{basic_deconv_block_forward.3} parent=5 // pred_region
      %s868 = ssub.s32 %s9, 2
      // Predicated region
      $region41: #{basic_deconv_block_forward.3} parent=39 // pred_check
        %p869 = pneg %p106
      $region42: #{basic_deconv_block_forward.3} parent=39 // pred_check_branch
        %871 = sbr.rel (%p869) target = $region44
      $region43: #{basic_deconv_block_forward.3} parent=39 // pred_region
        %s872 = smul.u32 64, %s15
        %p873 = scmp.lt.s32.totalorder %s872, 255
        %s874 = scalar_select %p873, %s872, 255
        %s875 = smul.addr %s874, 8
        %s876 = scalar_lea.vmem %s3, %s875
      $region44: #{basic_deconv_block_forward.3} parent=39 // pred_fallthru
        _
    $region40: #{basic_deconv_block_forward.3} parent=5 // pred_fallthru
      _
  $region6: #{basic_deconv_block_forward.3} parent=0 // loop_footer
    %s13 = sadd.s32 1, %s9
  $region7: #{basic_deconv_block_forward.3} parent=0 // loop_footer_branch
    %8 = sbr.rel target = $region3
  $region8: #{basic_deconv_block_forward.3} parent=0 // loop_exit
    _

</llo_original>
